<compile_context>
chip_gen: v5e
topology: v5e:2x2
jax: 0.10.0
libtpu: 0.0.40
codegen_flags: <defaults>
</compile_context>

<pallas_src>
import functools

import jax
import jax.numpy as jnp
from jax.experimental import pallas as pl


# ----------------------------------------------------------------------------
# Fused wavefront Pallas kernel: L x LSTM over time + final Linear
# ----------------------------------------------------------------------------
def wavefront_lstm_kernel(*refs, num_layers, T, B, H):
    """Single pallas_call (no grid), everything VMEM resident.

    inputs : x2d (T*B, D0), h0 (L, B, H), c0 (L, B, H),
             W_ih0^T (D0, 4H), b0 (1, 4H),
             rhs_rows (L, H, L*4H)   -- block recurrent/feed weights,
             [bias_rest (1, (L-1)*4H) if L > 1],
             W_final^T (H, O), b_final (1, O)
    outputs: y (B, O), hc (2L, B, H)   -- [h_1..h_L, c_1..c_L]
    """
    L, G = num_layers, 4 * H
    it = iter(refs)
    x_ref = next(it)
    h0_ref = next(it)
    c0_ref = next(it)
    wih0T_ref = next(it)
    b0_ref = next(it)
    rhs_ref = next(it)
    brest_ref = next(it) if L > 1 else None
    wfT_ref = next(it)
    bf_ref = next(it)
    y_ref = next(it)
    hc_ref = next(it)

    # Layer-0 input projection for the whole sequence, hoisted off the
    # recurrent critical path: one (T*B, D) @ (D, 4H) MXU matmul.
    xproj0 = (jnp.dot(x_ref[...], wih0T_ref[...],
                      preferred_element_type=jnp.float32) + b0_ref[...])

    # Recurrent/feed weight blocks & biases held resident across all steps.
    rhs_rows = [rhs_ref[l] for l in range(L)]          # each (H, L*4H)
    brest = brest_ref[...] if L > 1 else None          # (1, (L-1)*4H)

    h = [h0_ref[l] for l in range(L)]                  # each (B, H)
    c = [c0_ref[l] for l in range(L)]

    # Wavefront over the (layer, time) grid: step s handles layer l's
    # timestep t = s - l.  Serial chain length T + L - 1 instead of T * L.
    for s in range(T + L - 1):
        # Fused gate pre-activations for ALL layers this step: (B, L*4H).
        # Column block l = h_{l-1} @ W_ih_l^T + h_l @ W_hh_l^T.
        mm = jnp.dot(h[0], rhs_rows[0], preferred_element_type=jnp.float32)
        for l in range(1, L):
            mm = mm + jnp.dot(h[l], rhs_rows[l],
                              preferred_element_type=jnp.float32)

        for l in range(L):
            t = s - l
            if t < 0 or t >= T:
                continue                                # layer inactive (edge)
            if l == 0:
                gates = mm[:, 0:G] + xproj0[t * B:(t + 1) * B, :]
            else:
                gates = mm[:, l * G:(l + 1) * G] + brest[:, (l - 1) * G:l * G]

            # Full-width nonlinearities (one sigmoid + one tanh over the whole
            # (B, 4H) vreg), then 32-lane slices.
            sg = jax.nn.sigmoid(gates)
            th = jnp.tanh(gates)
            i_g = sg[:, 0 * H:1 * H]
            f_g = sg[:, 1 * H:2 * H]
            o_g = sg[:, 3 * H:4 * H]
            g_g = th[:, 2 * H:3 * H]
            c[l] = f_g * c[l] + i_g * g_g
            h[l] = o_g * jnp.tanh(c[l])

    # Consolidated state writeback: [h_1..h_L, c_1..c_L] in one output slab.
    for l in range(L):
        hc_ref[l] = h[l].astype(hc_ref.dtype)
        hc_ref[L + l] = c[l].astype(hc_ref.dtype)

    # Dropout has p=0.0 -> identity (eval mode); final Linear on lstm_out[-1].
    y_ref[...] = (jnp.dot(h[L - 1], wfT_ref[...],
                          preferred_element_type=jnp.float32)
                  + bf_ref[...]).astype(y_ref.dtype)


# ----------------------------------------------------------------------------
# One-time parameter preparation (model-init time, NOT on the per-call path)
# ----------------------------------------------------------------------------
def prepare_params(params, num_layers):
    L = num_layers
    H = params["lstm"][0][1].shape[1]        # w_hh: (4H, H)
    G = 4 * H
    w_ih0, w_hh0, b_ih0, b_hh0 = params["lstm"][0]
    prep = {
        "wih0T": jnp.asarray(w_ih0).T,                      # (D0, 4H)
        "b0": (b_ih0 + b_hh0).reshape(1, G),                # fused layer-0 bias
        "wfT": jnp.asarray(params["final_w"]).T,            # (H, O)
        "bf": params["final_b"].reshape(1, -1),             # (1, O)
    }
    # Block weight matrix rows: layer l's row carries W_hh_l^T in column block
    # l and W_ih_{l+1}^T in column block l+1 (zeros elsewhere).
    rhs = jnp.zeros((L, H, L * G), jnp.float32)
    for l in range(L):
        w_hh_l = params["lstm"][l][1]                       # (4H, H)
        rhs = rhs.at[l, :, l * G:(l + 1) * G].set(w_hh_l.T)
        if l + 1 < L:
            w_ih_next = params["lstm"][l + 1][0]            # (4H, H)
            rhs = rhs.at[l, :, (l + 1) * G:(l + 2) * G].set(w_ih_next.T)
    prep["rhs_rows"] = rhs
    if L > 1:
        prep["bias_rest"] = jnp.concatenate(
            [(params["lstm"][l][2] + params["lstm"][l][3]).reshape(1, G)
             for l in range(1, L)], axis=1)                 # (1, (L-1)*4H)
    return prep


# ----------------------------------------------------------------------------
# Wrapper (per-call path: only a free contiguous reshape of x)
# ----------------------------------------------------------------------------
@functools.partial(jax.jit, static_argnames=("num_layers",))
def pytorch_lstm_forward(x, states, prep, *, num_layers):
    """Forward pass matching pytorch_LSTM.forward (dropout p=0.0 -> identity)."""
    h0, c0 = states                                   # each (L, B, H)
    T, B, D = x.shape
    H = h0.shape[2]
    O = prep["wfT"].shape[1]

    x2d = x.reshape(T * B, D)                         # contiguous -> free

    args = [x2d, h0, c0, prep["wih0T"], prep["b0"], prep["rhs_rows"]]
    if num_layers > 1:
        args.append(prep["bias_rest"])
    args += [prep["wfT"], prep["bf"]]

    kernel = functools.partial(wavefront_lstm_kernel, num_layers=num_layers,
                               T=T, B=B, H=H)

    y, hc = pl.pallas_call(
        kernel,
        out_shape=(jax.ShapeDtypeStruct((B, O), jnp.float32),
                   jax.ShapeDtypeStruct((2 * num_layers, B, H), jnp.float32)),
    )(*args)

    hT = hc[:num_layers]
    cT = hc[num_layers:]
    return y.reshape(-1), (hT, cT)


# ----------------------------------------------------------------------------
# Pure-JAX reference (for correctness check)
# ----------------------------------------------------------------------------
def reference_forward(x, states, params, num_layers):
    h0, c0 = states
    out = x
    hs, cs = [], []
    for l in range(num_layers):
        w_ih, w_hh, b_ih, b_hh = params["lstm"][l]
        H = w_hh.shape[1]
        h, c = h0[l], c0[l]
        ys = []
        for t in range(out.shape[0]):
            g = out[t] @ w_ih.T + h @ w_hh.T + b_ih + b_hh
            i = jax.nn.sigmoid(g[:, 0 * H:1 * H])
            f = jax.nn.sigmoid(g[:, 1 * H:2 * H])
            gg = jnp.tanh(g[:, 2 * H:3 * H])
            o = jax.nn.sigmoid(g[:, 3 * H:4 * H])
            c = f * c + i * gg
            h = o * jnp.tanh(c)
            ys.append(h)
        out = jnp.stack(ys)
        hs.append(h)
        cs.append(c)
    y = out[-1] @ params["final_w"].T + params["final_b"]
    return y.reshape(-1), (jnp.stack(hs), jnp.stack(cs))


# ----------------------------------------------------------------------------
# Main
# ----------------------------------------------------------------------------
if __name__ == "__main__":
    # Module hyperparameters (small, consistent with pytorch_LSTM.__init__)
    input_dim, hidden_dim, batch_size = 8, 32, 4
    output_dim, num_layers, dropout = 2, 2, 0.0
    seq_len = 8

    key = jax.random.PRNGKey(0)
    keys = jax.random.split(key, 4 * num_layers + 3)

    # Deterministic parameter init (shapes follow torch.nn.LSTM / nn.Linear).
    params = {"lstm": []}
    k = 0
    for l in range(num_layers):
        d_in = input_dim if l == 0 else hidden_dim
        scale_ih = (6.0 / (4 * hidden_dim + d_in)) ** 0.5
        scale_hh = (6.0 / (4 * hidden_dim + hidden_dim)) ** 0.5
        w_ih = jax.random.uniform(keys[k], (4 * hidden_dim, d_in),
                                  jnp.float32, -scale_ih, scale_ih); k += 1
        w_hh = jax.random.uniform(keys[k], (4 * hidden_dim, hidden_dim),
                                  jnp.float32, -scale_hh, scale_hh); k += 1
        b_ih = jnp.zeros((4 * hidden_dim,), jnp.float32)
        b_hh = jnp.zeros((4 * hidden_dim,), jnp.float32)
        params["lstm"].append((w_ih, w_hh, b_ih, b_hh))
        k += 2
    scale_f = (6.0 / (hidden_dim + output_dim)) ** 0.5
    params["final_w"] = jax.random.uniform(keys[k], (output_dim, hidden_dim),
                                           jnp.float32, -scale_f, scale_f); k += 1
    params["final_b"] = jnp.zeros((output_dim,), jnp.float32)

    # One-time parameter preparation (model init), off the per-call path.
    prep = prepare_params(params, num_layers)
    prep = jax.tree_util.tree_map(jax.block_until_ready, prep)

    # Inputs: sequence (seq_len, batch, input_dim) and zero initial states.
    x = jax.random.normal(keys[k], (seq_len, batch_size, input_dim),
                          jnp.float32); k += 1
    states0 = (jnp.zeros((num_layers, batch_size, hidden_dim), jnp.float32),
               jnp.zeros((num_layers, batch_size, hidden_dim), jnp.float32))

    y_pred, (h_out, c_out) = pytorch_lstm_forward(
        x, states0, prep, num_layers=num_layers)
    jax.block_until_ready((y_pred, h_out, c_out))

    # Correctness check against a pure-JAX reference.
    y_ref, (h_ref, c_ref) = reference_forward(x, states0, params, num_layers)
    assert y_pred.shape == (batch_size * output_dim,)
    assert h_out.shape == (num_layers, batch_size, hidden_dim)
    assert c_out.shape == (num_layers, batch_size, hidden_dim)
    assert jnp.allclose(y_pred, y_ref, atol=5e-5, rtol=1e-4)
    assert jnp.allclose(h_out, h_ref, atol=5e-5, rtol=1e-4)
    assert jnp.allclose(c_out, c_ref, atol=5e-5, rtol=1e-4)

    print("KERNEL_OK")
</pallas_src>

<mosaic_0001>
module attributes {stable_mosaic.version = 11 : i64} {
  func.func @wavefront_lstm_kernel(%arg0: memref<32x8xf32, #tpu.memory_space<vmem>>, %arg1: memref<2x4x32xf32, #tpu.memory_space<vmem>>, %arg2: memref<2x4x32xf32, #tpu.memory_space<vmem>>, %arg3: memref<8x128xf32, #tpu.memory_space<vmem>>, %arg4: memref<1x128xf32, #tpu.memory_space<vmem>>, %arg5: memref<2x32x256xf32, #tpu.memory_space<vmem>>, %arg6: memref<1x128xf32, #tpu.memory_space<vmem>>, %arg7: memref<32x2xf32, #tpu.memory_space<vmem>>, %arg8: memref<1x2xf32, #tpu.memory_space<vmem>>, %arg9: memref<4x2xf32, #tpu.memory_space<vmem>>, %arg10: memref<4x4x32xf32, #tpu.memory_space<vmem>>) attributes {dimension_semantics = [], scalar_prefetch = 0 : i64, scratch_operands = 0 : i64, tpu.core_type = #tpu.core_type<tc>} {
    %c0 = arith.constant 0 : index
    %c0_0 = arith.constant 0 : index
    %0 = vector.load %arg0[%c0, %c0_0] : memref<32x8xf32, #tpu.memory_space<vmem>>, vector<32x8xf32>
    %c0_1 = arith.constant 0 : index
    %c0_2 = arith.constant 0 : index
    %1 = vector.load %arg3[%c0_1, %c0_2] : memref<8x128xf32, #tpu.memory_space<vmem>>, vector<8x128xf32>
    %cst = arith.constant dense<0.000000e+00> : vector<32x128xf32>
    %2 = tpu.matmul %0, %1, %cst {dimension_numbers = #tpu.dot_dimension_numbers<[1], [0], [0], [1], [0, 0, 1, 1], [], []>} : vector<32x8xf32>, vector<8x128xf32>, vector<32x128xf32> -> vector<32x128xf32>
    %c0_3 = arith.constant 0 : index
    %c0_4 = arith.constant 0 : index
    %3 = vector.load %arg4[%c0_3, %c0_4] : memref<1x128xf32, #tpu.memory_space<vmem>>, vector<1x128xf32>
    %4 = vector.broadcast %3 : vector<1x128xf32> to vector<32x128xf32>
    %5 = arith.addf %2, %4 : vector<32x128xf32>
    %c0_5 = arith.constant 0 : index
    %c0_6 = arith.constant 0 : index
    %c0_7 = arith.constant 0 : index
    %6 = vector.load %arg5[%c0_5, %c0_6, %c0_7] : memref<2x32x256xf32, #tpu.memory_space<vmem>>, vector<1x32x256xf32>
    %7 = vector.shape_cast %6 : vector<1x32x256xf32> to vector<32x256xf32>
    %c1 = arith.constant 1 : index
    %c0_8 = arith.constant 0 : index
    %c0_9 = arith.constant 0 : index
    %8 = vector.load %arg5[%c1, %c0_8, %c0_9] : memref<2x32x256xf32, #tpu.memory_space<vmem>>, vector<1x32x256xf32>
    %9 = vector.shape_cast %8 : vector<1x32x256xf32> to vector<32x256xf32>
    %c0_10 = arith.constant 0 : index
    %c0_11 = arith.constant 0 : index
    %10 = vector.load %arg6[%c0_10, %c0_11] : memref<1x128xf32, #tpu.memory_space<vmem>>, vector<1x128xf32>
    %c0_12 = arith.constant 0 : index
    %c0_13 = arith.constant 0 : index
    %c0_14 = arith.constant 0 : index
    %11 = vector.load %arg1[%c0_12, %c0_13, %c0_14] : memref<2x4x32xf32, #tpu.memory_space<vmem>>, vector<1x4x32xf32>
    %12 = vector.shape_cast %11 : vector<1x4x32xf32> to vector<4x32xf32>
    %c1_15 = arith.constant 1 : index
    %c0_16 = arith.constant 0 : index
    %c0_17 = arith.constant 0 : index
    %13 = vector.load %arg1[%c1_15, %c0_16, %c0_17] : memref<2x4x32xf32, #tpu.memory_space<vmem>>, vector<1x4x32xf32>
    %14 = vector.shape_cast %13 : vector<1x4x32xf32> to vector<4x32xf32>
    %c0_18 = arith.constant 0 : index
    %c0_19 = arith.constant 0 : index
    %c0_20 = arith.constant 0 : index
    %15 = vector.load %arg2[%c0_18, %c0_19, %c0_20] : memref<2x4x32xf32, #tpu.memory_space<vmem>>, vector<1x4x32xf32>
    %16 = vector.shape_cast %15 : vector<1x4x32xf32> to vector<4x32xf32>
    %c1_21 = arith.constant 1 : index
    %c0_22 = arith.constant 0 : index
    %c0_23 = arith.constant 0 : index
    %17 = vector.load %arg2[%c1_21, %c0_22, %c0_23] : memref<2x4x32xf32, #tpu.memory_space<vmem>>, vector<1x4x32xf32>
    %18 = vector.shape_cast %17 : vector<1x4x32xf32> to vector<4x32xf32>
    %cst_24 = arith.constant dense<0.000000e+00> : vector<4x256xf32>
    %19 = tpu.matmul %12, %7, %cst_24 {dimension_numbers = #tpu.dot_dimension_numbers<[1], [0], [0], [1], [0, 0, 1, 1], [], []>} : vector<4x32xf32>, vector<32x256xf32>, vector<4x256xf32> -> vector<4x256xf32>
    %cst_25 = arith.constant dense<0.000000e+00> : vector<4x256xf32>
    %20 = tpu.matmul %14, %9, %cst_25 {dimension_numbers = #tpu.dot_dimension_numbers<[1], [0], [0], [1], [0, 0, 1, 1], [], []>} : vector<4x32xf32>, vector<32x256xf32>, vector<4x256xf32> -> vector<4x256xf32>
    %21 = arith.addf %19, %20 : vector<4x256xf32>
    %22 = vector.extract_strided_slice %21 {offsets = [0, 0], sizes = [4, 128], strides = [1, 1]} : vector<4x256xf32> to vector<4x128xf32>
    %23 = vector.extract_strided_slice %5 {offsets = [0, 0], sizes = [4, 128], strides = [1, 1]} : vector<32x128xf32> to vector<4x128xf32>
    %24 = arith.addf %22, %23 : vector<4x128xf32>
    %25 = arith.negf %24 : vector<4x128xf32>
    %26 = math.exp %25 : vector<4x128xf32>
    %cst_26 = arith.constant 1.000000e+00 : f32
    %27 = vector.broadcast %cst_26 : f32 to vector<4x128xf32>
    %28 = arith.addf %27, %26 : vector<4x128xf32>
    %29 = arith.divf %27, %28 : vector<4x128xf32>
    %30 = math.tanh %24 : vector<4x128xf32>
    %31 = vector.extract_strided_slice %29 {offsets = [0, 0], sizes = [4, 32], strides = [1, 1]} : vector<4x128xf32> to vector<4x32xf32>
    %32 = vector.extract_strided_slice %29 {offsets = [0, 32], sizes = [4, 32], strides = [1, 1]} : vector<4x128xf32> to vector<4x32xf32>
    %33 = vector.extract_strided_slice %29 {offsets = [0, 96], sizes = [4, 32], strides = [1, 1]} : vector<4x128xf32> to vector<4x32xf32>
    %34 = vector.extract_strided_slice %30 {offsets = [0, 64], sizes = [4, 32], strides = [1, 1]} : vector<4x128xf32> to vector<4x32xf32>
    %35 = arith.mulf %32, %16 : vector<4x32xf32>
    %36 = arith.mulf %31, %34 : vector<4x32xf32>
    %37 = arith.addf %35, %36 : vector<4x32xf32>
    %38 = math.tanh %37 : vector<4x32xf32>
    %39 = arith.mulf %33, %38 : vector<4x32xf32>
    %cst_27 = arith.constant dense<0.000000e+00> : vector<4x256xf32>
    %40 = tpu.matmul %39, %7, %cst_27 {dimension_numbers = #tpu.dot_dimension_numbers<[1], [0], [0], [1], [0, 0, 1, 1], [], []>} : vector<4x32xf32>, vector<32x256xf32>, vector<4x256xf32> -> vector<4x256xf32>
    %cst_28 = arith.constant dense<0.000000e+00> : vector<4x256xf32>
    %41 = tpu.matmul %14, %9, %cst_28 {dimension_numbers = #tpu.dot_dimension_numbers<[1], [0], [0], [1], [0, 0, 1, 1], [], []>} : vector<4x32xf32>, vector<32x256xf32>, vector<4x256xf32> -> vector<4x256xf32>
    %42 = arith.addf %40, %41 : vector<4x256xf32>
    %43 = vector.extract_strided_slice %42 {offsets = [0, 0], sizes = [4, 128], strides = [1, 1]} : vector<4x256xf32> to vector<4x128xf32>
    %44 = vector.extract_strided_slice %5 {offsets = [4, 0], sizes = [4, 128], strides = [1, 1]} : vector<32x128xf32> to vector<4x128xf32>
    %45 = arith.addf %43, %44 : vector<4x128xf32>
    %46 = arith.negf %45 : vector<4x128xf32>
    %47 = math.exp %46 : vector<4x128xf32>
    %cst_29 = arith.constant 1.000000e+00 : f32
    %48 = vector.broadcast %cst_29 : f32 to vector<4x128xf32>
    %49 = arith.addf %48, %47 : vector<4x128xf32>
    %50 = arith.divf %48, %49 : vector<4x128xf32>
    %51 = math.tanh %45 : vector<4x128xf32>
    %52 = vector.extract_strided_slice %50 {offsets = [0, 0], sizes = [4, 32], strides = [1, 1]} : vector<4x128xf32> to vector<4x32xf32>
    %53 = vector.extract_strided_slice %50 {offsets = [0, 32], sizes = [4, 32], strides = [1, 1]} : vector<4x128xf32> to vector<4x32xf32>
    %54 = vector.extract_strided_slice %50 {offsets = [0, 96], sizes = [4, 32], strides = [1, 1]} : vector<4x128xf32> to vector<4x32xf32>
    %55 = vector.extract_strided_slice %51 {offsets = [0, 64], sizes = [4, 32], strides = [1, 1]} : vector<4x128xf32> to vector<4x32xf32>
    %56 = arith.mulf %53, %37 : vector<4x32xf32>
    %57 = arith.mulf %52, %55 : vector<4x32xf32>
    %58 = arith.addf %56, %57 : vector<4x32xf32>
    %59 = math.tanh %58 : vector<4x32xf32>
    %60 = arith.mulf %54, %59 : vector<4x32xf32>
    %61 = vector.extract_strided_slice %42 {offsets = [0, 128], sizes = [4, 128], strides = [1, 1]} : vector<4x256xf32> to vector<4x128xf32>
    %62 = vector.broadcast %10 : vector<1x128xf32> to vector<4x128xf32>
    %63 = arith.addf %61, %62 : vector<4x128xf32>
    %64 = arith.negf %63 : vector<4x128xf32>
    %65 = math.exp %64 : vector<4x128xf32>
    %cst_30 = arith.constant 1.000000e+00 : f32
    %66 = vector.broadcast %cst_30 : f32 to vector<4x128xf32>
    %67 = arith.addf %66, %65 : vector<4x128xf32>
    %68 = arith.divf %66, %67 : vector<4x128xf32>
    %69 = math.tanh %63 : vector<4x128xf32>
    %70 = vector.extract_strided_slice %68 {offsets = [0, 0], sizes = [4, 32], strides = [1, 1]} : vector<4x128xf32> to vector<4x32xf32>
    %71 = vector.extract_strided_slice %68 {offsets = [0, 32], sizes = [4, 32], strides = [1, 1]} : vector<4x128xf32> to vector<4x32xf32>
    %72 = vector.extract_strided_slice %68 {offsets = [0, 96], sizes = [4, 32], strides = [1, 1]} : vector<4x128xf32> to vector<4x32xf32>
    %73 = vector.extract_strided_slice %69 {offsets = [0, 64], sizes = [4, 32], strides = [1, 1]} : vector<4x128xf32> to vector<4x32xf32>
    %74 = arith.mulf %71, %18 : vector<4x32xf32>
    %75 = arith.mulf %70, %73 : vector<4x32xf32>
    %76 = arith.addf %74, %75 : vector<4x32xf32>
    %77 = math.tanh %76 : vector<4x32xf32>
    %78 = arith.mulf %72, %77 : vector<4x32xf32>
    %cst_31 = arith.constant dense<0.000000e+00> : vector<4x256xf32>
    %79 = tpu.matmul %60, %7, %cst_31 {dimension_numbers = #tpu.dot_dimension_numbers<[1], [0], [0], [1], [0, 0, 1, 1], [], []>} : vector<4x32xf32>, vector<32x256xf32>, vector<4x256xf32> -> vector<4x256xf32>
    %cst_32 = arith.constant dense<0.000000e+00> : vector<4x256xf32>
    %80 = tpu.matmul %78, %9, %cst_32 {dimension_numbers = #tpu.dot_dimension_numbers<[1], [0], [0], [1], [0, 0, 1, 1], [], []>} : vector<4x32xf32>, vector<32x256xf32>, vector<4x256xf32> -> vector<4x256xf32>
    %81 = arith.addf %79, %80 : vector<4x256xf32>
    %82 = vector.extract_strided_slice %81 {offsets = [0, 0], sizes = [4, 128], strides = [1, 1]} : vector<4x256xf32> to vector<4x128xf32>
    %83 = vector.extract_strided_slice %5 {offsets = [8, 0], sizes = [4, 128], strides = [1, 1]} : vector<32x128xf32> to vector<4x128xf32>
    %84 = arith.addf %82, %83 : vector<4x128xf32>
    %85 = arith.negf %84 : vector<4x128xf32>
    %86 = math.exp %85 : vector<4x128xf32>
    %cst_33 = arith.constant 1.000000e+00 : f32
    %87 = vector.broadcast %cst_33 : f32 to vector<4x128xf32>
    %88 = arith.addf %87, %86 : vector<4x128xf32>
    %89 = arith.divf %87, %88 : vector<4x128xf32>
    %90 = math.tanh %84 : vector<4x128xf32>
    %91 = vector.extract_strided_slice %89 {offsets = [0, 0], sizes = [4, 32], strides = [1, 1]} : vector<4x128xf32> to vector<4x32xf32>
    %92 = vector.extract_strided_slice %89 {offsets = [0, 32], sizes = [4, 32], strides = [1, 1]} : vector<4x128xf32> to vector<4x32xf32>
    %93 = vector.extract_strided_slice %89 {offsets = [0, 96], sizes = [4, 32], strides = [1, 1]} : vector<4x128xf32> to vector<4x32xf32>
    %94 = vector.extract_strided_slice %90 {offsets = [0, 64], sizes = [4, 32], strides = [1, 1]} : vector<4x128xf32> to vector<4x32xf32>
    %95 = arith.mulf %92, %58 : vector<4x32xf32>
    %96 = arith.mulf %91, %94 : vector<4x32xf32>
    %97 = arith.addf %95, %96 : vector<4x32xf32>
    %98 = math.tanh %97 : vector<4x32xf32>
    %99 = arith.mulf %93, %98 : vector<4x32xf32>
    %100 = vector.extract_strided_slice %81 {offsets = [0, 128], sizes = [4, 128], strides = [1, 1]} : vector<4x256xf32> to vector<4x128xf32>
    %101 = vector.broadcast %10 : vector<1x128xf32> to vector<4x128xf32>
    %102 = arith.addf %100, %101 : vector<4x128xf32>
    %103 = arith.negf %102 : vector<4x128xf32>
    %104 = math.exp %103 : vector<4x128xf32>
    %cst_34 = arith.constant 1.000000e+00 : f32
    %105 = vector.broadcast %cst_34 : f32 to vector<4x128xf32>
    %106 = arith.addf %105, %104 : vector<4x128xf32>
    %107 = arith.divf %105, %106 : vector<4x128xf32>
    %108 = math.tanh %102 : vector<4x128xf32>
    %109 = vector.extract_strided_slice %107 {offsets = [0, 0], sizes = [4, 32], strides = [1, 1]} : vector<4x128xf32> to vector<4x32xf32>
    %110 = vector.extract_strided_slice %107 {offsets = [0, 32], sizes = [4, 32], strides = [1, 1]} : vector<4x128xf32> to vector<4x32xf32>
    %111 = vector.extract_strided_slice %107 {offsets = [0, 96], sizes = [4, 32], strides = [1, 1]} : vector<4x128xf32> to vector<4x32xf32>
    %112 = vector.extract_strided_slice %108 {offsets = [0, 64], sizes = [4, 32], strides = [1, 1]} : vector<4x128xf32> to vector<4x32xf32>
    %113 = arith.mulf %110, %76 : vector<4x32xf32>
    %114 = arith.mulf %109, %112 : vector<4x32xf32>
    %115 = arith.addf %113, %114 : vector<4x32xf32>
    %116 = math.tanh %115 : vector<4x32xf32>
    %117 = arith.mulf %111, %116 : vector<4x32xf32>
    %cst_35 = arith.constant dense<0.000000e+00> : vector<4x256xf32>
    %118 = tpu.matmul %99, %7, %cst_35 {dimension_numbers = #tpu.dot_dimension_numbers<[1], [0], [0], [1], [0, 0, 1, 1], [], []>} : vector<4x32xf32>, vector<32x256xf32>, vector<4x256xf32> -> vector<4x256xf32>
    %cst_36 = arith.constant dense<0.000000e+00> : vector<4x256xf32>
    %119 = tpu.matmul %117, %9, %cst_36 {dimension_numbers = #tpu.dot_dimension_numbers<[1], [0], [0], [1], [0, 0, 1, 1], [], []>} : vector<4x32xf32>, vector<32x256xf32>, vector<4x256xf32> -> vector<4x256xf32>
    %120 = arith.addf %118, %119 : vector<4x256xf32>
    %121 = vector.extract_strided_slice %120 {offsets = [0, 0], sizes = [4, 128], strides = [1, 1]} : vector<4x256xf32> to vector<4x128xf32>
    %122 = vector.extract_strided_slice %5 {offsets = [12, 0], sizes = [4, 128], strides = [1, 1]} : vector<32x128xf32> to vector<4x128xf32>
    %123 = arith.addf %121, %122 : vector<4x128xf32>
    %124 = arith.negf %123 : vector<4x128xf32>
    %125 = math.exp %124 : vector<4x128xf32>
    %cst_37 = arith.constant 1.000000e+00 : f32
    %126 = vector.broadcast %cst_37 : f32 to vector<4x128xf32>
    %127 = arith.addf %126, %125 : vector<4x128xf32>
    %128 = arith.divf %126, %127 : vector<4x128xf32>
    %129 = math.tanh %123 : vector<4x128xf32>
    %130 = vector.extract_strided_slice %128 {offsets = [0, 0], sizes = [4, 32], strides = [1, 1]} : vector<4x128xf32> to vector<4x32xf32>
    %131 = vector.extract_strided_slice %128 {offsets = [0, 32], sizes = [4, 32], strides = [1, 1]} : vector<4x128xf32> to vector<4x32xf32>
    %132 = vector.extract_strided_slice %128 {offsets = [0, 96], sizes = [4, 32], strides = [1, 1]} : vector<4x128xf32> to vector<4x32xf32>
    %133 = vector.extract_strided_slice %129 {offsets = [0, 64], sizes = [4, 32], strides = [1, 1]} : vector<4x128xf32> to vector<4x32xf32>
    %134 = arith.mulf %131, %97 : vector<4x32xf32>
    %135 = arith.mulf %130, %133 : vector<4x32xf32>
    %136 = arith.addf %134, %135 : vector<4x32xf32>
    %137 = math.tanh %136 : vector<4x32xf32>
    %138 = arith.mulf %132, %137 : vector<4x32xf32>
    %139 = vector.extract_strided_slice %120 {offsets = [0, 128], sizes = [4, 128], strides = [1, 1]} : vector<4x256xf32> to vector<4x128xf32>
    %140 = vector.broadcast %10 : vector<1x128xf32> to vector<4x128xf32>
    %141 = arith.addf %139, %140 : vector<4x128xf32>
    %142 = arith.negf %141 : vector<4x128xf32>
    %143 = math.exp %142 : vector<4x128xf32>
    %cst_38 = arith.constant 1.000000e+00 : f32
    %144 = vector.broadcast %cst_38 : f32 to vector<4x128xf32>
    %145 = arith.addf %144, %143 : vector<4x128xf32>
    %146 = arith.divf %144, %145 : vector<4x128xf32>
    %147 = math.tanh %141 : vector<4x128xf32>
    %148 = vector.extract_strided_slice %146 {offsets = [0, 0], sizes = [4, 32], strides = [1, 1]} : vector<4x128xf32> to vector<4x32xf32>
    %149 = vector.extract_strided_slice %146 {offsets = [0, 32], sizes = [4, 32], strides = [1, 1]} : vector<4x128xf32> to vector<4x32xf32>
    %150 = vector.extract_strided_slice %146 {offsets = [0, 96], sizes = [4, 32], strides = [1, 1]} : vector<4x128xf32> to vector<4x32xf32>
    %151 = vector.extract_strided_slice %147 {offsets = [0, 64], sizes = [4, 32], strides = [1, 1]} : vector<4x128xf32> to vector<4x32xf32>
    %152 = arith.mulf %149, %115 : vector<4x32xf32>
    %153 = arith.mulf %148, %151 : vector<4x32xf32>
    %154 = arith.addf %152, %153 : vector<4x32xf32>
    %155 = math.tanh %154 : vector<4x32xf32>
    %156 = arith.mulf %150, %155 : vector<4x32xf32>
    %cst_39 = arith.constant dense<0.000000e+00> : vector<4x256xf32>
    %157 = tpu.matmul %138, %7, %cst_39 {dimension_numbers = #tpu.dot_dimension_numbers<[1], [0], [0], [1], [0, 0, 1, 1], [], []>} : vector<4x32xf32>, vector<32x256xf32>, vector<4x256xf32> -> vector<4x256xf32>
    %cst_40 = arith.constant dense<0.000000e+00> : vector<4x256xf32>
    %158 = tpu.matmul %156, %9, %cst_40 {dimension_numbers = #tpu.dot_dimension_numbers<[1], [0], [0], [1], [0, 0, 1, 1], [], []>} : vector<4x32xf32>, vector<32x256xf32>, vector<4x256xf32> -> vector<4x256xf32>
    %159 = arith.addf %157, %158 : vector<4x256xf32>
    %160 = vector.extract_strided_slice %159 {offsets = [0, 0], sizes = [4, 128], strides = [1, 1]} : vector<4x256xf32> to vector<4x128xf32>
    %161 = vector.extract_strided_slice %5 {offsets = [16, 0], sizes = [4, 128], strides = [1, 1]} : vector<32x128xf32> to vector<4x128xf32>
    %162 = arith.addf %160, %161 : vector<4x128xf32>
    %163 = arith.negf %162 : vector<4x128xf32>
    %164 = math.exp %163 : vector<4x128xf32>
    %cst_41 = arith.constant 1.000000e+00 : f32
    %165 = vector.broadcast %cst_41 : f32 to vector<4x128xf32>
    %166 = arith.addf %165, %164 : vector<4x128xf32>
    %167 = arith.divf %165, %166 : vector<4x128xf32>
    %168 = math.tanh %162 : vector<4x128xf32>
    %169 = vector.extract_strided_slice %167 {offsets = [0, 0], sizes = [4, 32], strides = [1, 1]} : vector<4x128xf32> to vector<4x32xf32>
    %170 = vector.extract_strided_slice %167 {offsets = [0, 32], sizes = [4, 32], strides = [1, 1]} : vector<4x128xf32> to vector<4x32xf32>
    %171 = vector.extract_strided_slice %167 {offsets = [0, 96], sizes = [4, 32], strides = [1, 1]} : vector<4x128xf32> to vector<4x32xf32>
    %172 = vector.extract_strided_slice %168 {offsets = [0, 64], sizes = [4, 32], strides = [1, 1]} : vector<4x128xf32> to vector<4x32xf32>
    %173 = arith.mulf %170, %136 : vector<4x32xf32>
    %174 = arith.mulf %169, %172 : vector<4x32xf32>
    %175 = arith.addf %173, %174 : vector<4x32xf32>
    %176 = math.tanh %175 : vector<4x32xf32>
    %177 = arith.mulf %171, %176 : vector<4x32xf32>
    %178 = vector.extract_strided_slice %159 {offsets = [0, 128], sizes = [4, 128], strides = [1, 1]} : vector<4x256xf32> to vector<4x128xf32>
    %179 = vector.broadcast %10 : vector<1x128xf32> to vector<4x128xf32>
    %180 = arith.addf %178, %179 : vector<4x128xf32>
    %181 = arith.negf %180 : vector<4x128xf32>
    %182 = math.exp %181 : vector<4x128xf32>
    %cst_42 = arith.constant 1.000000e+00 : f32
    %183 = vector.broadcast %cst_42 : f32 to vector<4x128xf32>
    %184 = arith.addf %183, %182 : vector<4x128xf32>
    %185 = arith.divf %183, %184 : vector<4x128xf32>
    %186 = math.tanh %180 : vector<4x128xf32>
    %187 = vector.extract_strided_slice %185 {offsets = [0, 0], sizes = [4, 32], strides = [1, 1]} : vector<4x128xf32> to vector<4x32xf32>
    %188 = vector.extract_strided_slice %185 {offsets = [0, 32], sizes = [4, 32], strides = [1, 1]} : vector<4x128xf32> to vector<4x32xf32>
    %189 = vector.extract_strided_slice %185 {offsets = [0, 96], sizes = [4, 32], strides = [1, 1]} : vector<4x128xf32> to vector<4x32xf32>
    %190 = vector.extract_strided_slice %186 {offsets = [0, 64], sizes = [4, 32], strides = [1, 1]} : vector<4x128xf32> to vector<4x32xf32>
    %191 = arith.mulf %188, %154 : vector<4x32xf32>
    %192 = arith.mulf %187, %190 : vector<4x32xf32>
    %193 = arith.addf %191, %192 : vector<4x32xf32>
    %194 = math.tanh %193 : vector<4x32xf32>
    %195 = arith.mulf %189, %194 : vector<4x32xf32>
    %cst_43 = arith.constant dense<0.000000e+00> : vector<4x256xf32>
    %196 = tpu.matmul %177, %7, %cst_43 {dimension_numbers = #tpu.dot_dimension_numbers<[1], [0], [0], [1], [0, 0, 1, 1], [], []>} : vector<4x32xf32>, vector<32x256xf32>, vector<4x256xf32> -> vector<4x256xf32>
    %cst_44 = arith.constant dense<0.000000e+00> : vector<4x256xf32>
    %197 = tpu.matmul %195, %9, %cst_44 {dimension_numbers = #tpu.dot_dimension_numbers<[1], [0], [0], [1], [0, 0, 1, 1], [], []>} : vector<4x32xf32>, vector<32x256xf32>, vector<4x256xf32> -> vector<4x256xf32>
    %198 = arith.addf %196, %197 : vector<4x256xf32>
    %199 = vector.extract_strided_slice %198 {offsets = [0, 0], sizes = [4, 128], strides = [1, 1]} : vector<4x256xf32> to vector<4x128xf32>
    %200 = vector.extract_strided_slice %5 {offsets = [20, 0], sizes = [4, 128], strides = [1, 1]} : vector<32x128xf32> to vector<4x128xf32>
    %201 = arith.addf %199, %200 : vector<4x128xf32>
    %202 = arith.negf %201 : vector<4x128xf32>
    %203 = math.exp %202 : vector<4x128xf32>
    %cst_45 = arith.constant 1.000000e+00 : f32
    %204 = vector.broadcast %cst_45 : f32 to vector<4x128xf32>
    %205 = arith.addf %204, %203 : vector<4x128xf32>
    %206 = arith.divf %204, %205 : vector<4x128xf32>
    %207 = math.tanh %201 : vector<4x128xf32>
    %208 = vector.extract_strided_slice %206 {offsets = [0, 0], sizes = [4, 32], strides = [1, 1]} : vector<4x128xf32> to vector<4x32xf32>
    %209 = vector.extract_strided_slice %206 {offsets = [0, 32], sizes = [4, 32], strides = [1, 1]} : vector<4x128xf32> to vector<4x32xf32>
    %210 = vector.extract_strided_slice %206 {offsets = [0, 96], sizes = [4, 32], strides = [1, 1]} : vector<4x128xf32> to vector<4x32xf32>
    %211 = vector.extract_strided_slice %207 {offsets = [0, 64], sizes = [4, 32], strides = [1, 1]} : vector<4x128xf32> to vector<4x32xf32>
    %212 = arith.mulf %209, %175 : vector<4x32xf32>
    %213 = arith.mulf %208, %211 : vector<4x32xf32>
    %214 = arith.addf %212, %213 : vector<4x32xf32>
    %215 = math.tanh %214 : vector<4x32xf32>
    %216 = arith.mulf %210, %215 : vector<4x32xf32>
    %217 = vector.extract_strided_slice %198 {offsets = [0, 128], sizes = [4, 128], strides = [1, 1]} : vector<4x256xf32> to vector<4x128xf32>
    %218 = vector.broadcast %10 : vector<1x128xf32> to vector<4x128xf32>
    %219 = arith.addf %217, %218 : vector<4x128xf32>
    %220 = arith.negf %219 : vector<4x128xf32>
    %221 = math.exp %220 : vector<4x128xf32>
    %cst_46 = arith.constant 1.000000e+00 : f32
    %222 = vector.broadcast %cst_46 : f32 to vector<4x128xf32>
    %223 = arith.addf %222, %221 : vector<4x128xf32>
    %224 = arith.divf %222, %223 : vector<4x128xf32>
    %225 = math.tanh %219 : vector<4x128xf32>
    %226 = vector.extract_strided_slice %224 {offsets = [0, 0], sizes = [4, 32], strides = [1, 1]} : vector<4x128xf32> to vector<4x32xf32>
    %227 = vector.extract_strided_slice %224 {offsets = [0, 32], sizes = [4, 32], strides = [1, 1]} : vector<4x128xf32> to vector<4x32xf32>
    %228 = vector.extract_strided_slice %224 {offsets = [0, 96], sizes = [4, 32], strides = [1, 1]} : vector<4x128xf32> to vector<4x32xf32>
    %229 = vector.extract_strided_slice %225 {offsets = [0, 64], sizes = [4, 32], strides = [1, 1]} : vector<4x128xf32> to vector<4x32xf32>
    %230 = arith.mulf %227, %193 : vector<4x32xf32>
    %231 = arith.mulf %226, %229 : vector<4x32xf32>
    %232 = arith.addf %230, %231 : vector<4x32xf32>
    %233 = math.tanh %232 : vector<4x32xf32>
    %234 = arith.mulf %228, %233 : vector<4x32xf32>
    %cst_47 = arith.constant dense<0.000000e+00> : vector<4x256xf32>
    %235 = tpu.matmul %216, %7, %cst_47 {dimension_numbers = #tpu.dot_dimension_numbers<[1], [0], [0], [1], [0, 0, 1, 1], [], []>} : vector<4x32xf32>, vector<32x256xf32>, vector<4x256xf32> -> vector<4x256xf32>
    %cst_48 = arith.constant dense<0.000000e+00> : vector<4x256xf32>
    %236 = tpu.matmul %234, %9, %cst_48 {dimension_numbers = #tpu.dot_dimension_numbers<[1], [0], [0], [1], [0, 0, 1, 1], [], []>} : vector<4x32xf32>, vector<32x256xf32>, vector<4x256xf32> -> vector<4x256xf32>
    %237 = arith.addf %235, %236 : vector<4x256xf32>
    %238 = vector.extract_strided_slice %237 {offsets = [0, 0], sizes = [4, 128], strides = [1, 1]} : vector<4x256xf32> to vector<4x128xf32>
    %239 = vector.extract_strided_slice %5 {offsets = [24, 0], sizes = [4, 128], strides = [1, 1]} : vector<32x128xf32> to vector<4x128xf32>
    %240 = arith.addf %238, %239 : vector<4x128xf32>
    %241 = arith.negf %240 : vector<4x128xf32>
    %242 = math.exp %241 : vector<4x128xf32>
    %cst_49 = arith.constant 1.000000e+00 : f32
    %243 = vector.broadcast %cst_49 : f32 to vector<4x128xf32>
    %244 = arith.addf %243, %242 : vector<4x128xf32>
    %245 = arith.divf %243, %244 : vector<4x128xf32>
    %246 = math.tanh %240 : vector<4x128xf32>
    %247 = vector.extract_strided_slice %245 {offsets = [0, 0], sizes = [4, 32], strides = [1, 1]} : vector<4x128xf32> to vector<4x32xf32>
    %248 = vector.extract_strided_slice %245 {offsets = [0, 32], sizes = [4, 32], strides = [1, 1]} : vector<4x128xf32> to vector<4x32xf32>
    %249 = vector.extract_strided_slice %245 {offsets = [0, 96], sizes = [4, 32], strides = [1, 1]} : vector<4x128xf32> to vector<4x32xf32>
    %250 = vector.extract_strided_slice %246 {offsets = [0, 64], sizes = [4, 32], strides = [1, 1]} : vector<4x128xf32> to vector<4x32xf32>
    %251 = arith.mulf %248, %214 : vector<4x32xf32>
    %252 = arith.mulf %247, %250 : vector<4x32xf32>
    %253 = arith.addf %251, %252 : vector<4x32xf32>
    %254 = math.tanh %253 : vector<4x32xf32>
    %255 = arith.mulf %249, %254 : vector<4x32xf32>
    %256 = vector.extract_strided_slice %237 {offsets = [0, 128], sizes = [4, 128], strides = [1, 1]} : vector<4x256xf32> to vector<4x128xf32>
    %257 = vector.broadcast %10 : vector<1x128xf32> to vector<4x128xf32>
    %258 = arith.addf %256, %257 : vector<4x128xf32>
    %259 = arith.negf %258 : vector<4x128xf32>
    %260 = math.exp %259 : vector<4x128xf32>
    %cst_50 = arith.constant 1.000000e+00 : f32
    %261 = vector.broadcast %cst_50 : f32 to vector<4x128xf32>
    %262 = arith.addf %261, %260 : vector<4x128xf32>
    %263 = arith.divf %261, %262 : vector<4x128xf32>
    %264 = math.tanh %258 : vector<4x128xf32>
    %265 = vector.extract_strided_slice %263 {offsets = [0, 0], sizes = [4, 32], strides = [1, 1]} : vector<4x128xf32> to vector<4x32xf32>
    %266 = vector.extract_strided_slice %263 {offsets = [0, 32], sizes = [4, 32], strides = [1, 1]} : vector<4x128xf32> to vector<4x32xf32>
    %267 = vector.extract_strided_slice %263 {offsets = [0, 96], sizes = [4, 32], strides = [1, 1]} : vector<4x128xf32> to vector<4x32xf32>
    %268 = vector.extract_strided_slice %264 {offsets = [0, 64], sizes = [4, 32], strides = [1, 1]} : vector<4x128xf32> to vector<4x32xf32>
    %269 = arith.mulf %266, %232 : vector<4x32xf32>
    %270 = arith.mulf %265, %268 : vector<4x32xf32>
    %271 = arith.addf %269, %270 : vector<4x32xf32>
    %272 = math.tanh %271 : vector<4x32xf32>
    %273 = arith.mulf %267, %272 : vector<4x32xf32>
    %cst_51 = arith.constant dense<0.000000e+00> : vector<4x256xf32>
    %274 = tpu.matmul %255, %7, %cst_51 {dimension_numbers = #tpu.dot_dimension_numbers<[1], [0], [0], [1], [0, 0, 1, 1], [], []>} : vector<4x32xf32>, vector<32x256xf32>, vector<4x256xf32> -> vector<4x256xf32>
    %cst_52 = arith.constant dense<0.000000e+00> : vector<4x256xf32>
    %275 = tpu.matmul %273, %9, %cst_52 {dimension_numbers = #tpu.dot_dimension_numbers<[1], [0], [0], [1], [0, 0, 1, 1], [], []>} : vector<4x32xf32>, vector<32x256xf32>, vector<4x256xf32> -> vector<4x256xf32>
    %276 = arith.addf %274, %275 : vector<4x256xf32>
    %277 = vector.extract_strided_slice %276 {offsets = [0, 0], sizes = [4, 128], strides = [1, 1]} : vector<4x256xf32> to vector<4x128xf32>
    %278 = vector.extract_strided_slice %5 {offsets = [28, 0], sizes = [4, 128], strides = [1, 1]} : vector<32x128xf32> to vector<4x128xf32>
    %279 = arith.addf %277, %278 : vector<4x128xf32>
    %280 = arith.negf %279 : vector<4x128xf32>
    %281 = math.exp %280 : vector<4x128xf32>
    %cst_53 = arith.constant 1.000000e+00 : f32
    %282 = vector.broadcast %cst_53 : f32 to vector<4x128xf32>
    %283 = arith.addf %282, %281 : vector<4x128xf32>
    %284 = arith.divf %282, %283 : vector<4x128xf32>
    %285 = math.tanh %279 : vector<4x128xf32>
    %286 = vector.extract_strided_slice %284 {offsets = [0, 0], sizes = [4, 32], strides = [1, 1]} : vector<4x128xf32> to vector<4x32xf32>
    %287 = vector.extract_strided_slice %284 {offsets = [0, 32], sizes = [4, 32], strides = [1, 1]} : vector<4x128xf32> to vector<4x32xf32>
    %288 = vector.extract_strided_slice %284 {offsets = [0, 96], sizes = [4, 32], strides = [1, 1]} : vector<4x128xf32> to vector<4x32xf32>
    %289 = vector.extract_strided_slice %285 {offsets = [0, 64], sizes = [4, 32], strides = [1, 1]} : vector<4x128xf32> to vector<4x32xf32>
    %290 = arith.mulf %287, %253 : vector<4x32xf32>
    %291 = arith.mulf %286, %289 : vector<4x32xf32>
    %292 = arith.addf %290, %291 : vector<4x32xf32>
    %293 = math.tanh %292 : vector<4x32xf32>
    %294 = arith.mulf %288, %293 : vector<4x32xf32>
    %295 = vector.extract_strided_slice %276 {offsets = [0, 128], sizes = [4, 128], strides = [1, 1]} : vector<4x256xf32> to vector<4x128xf32>
    %296 = vector.broadcast %10 : vector<1x128xf32> to vector<4x128xf32>
    %297 = arith.addf %295, %296 : vector<4x128xf32>
    %298 = arith.negf %297 : vector<4x128xf32>
    %299 = math.exp %298 : vector<4x128xf32>
    %cst_54 = arith.constant 1.000000e+00 : f32
    %300 = vector.broadcast %cst_54 : f32 to vector<4x128xf32>
    %301 = arith.addf %300, %299 : vector<4x128xf32>
    %302 = arith.divf %300, %301 : vector<4x128xf32>
    %303 = math.tanh %297 : vector<4x128xf32>
    %304 = vector.extract_strided_slice %302 {offsets = [0, 0], sizes = [4, 32], strides = [1, 1]} : vector<4x128xf32> to vector<4x32xf32>
    %305 = vector.extract_strided_slice %302 {offsets = [0, 32], sizes = [4, 32], strides = [1, 1]} : vector<4x128xf32> to vector<4x32xf32>
    %306 = vector.extract_strided_slice %302 {offsets = [0, 96], sizes = [4, 32], strides = [1, 1]} : vector<4x128xf32> to vector<4x32xf32>
    %307 = vector.extract_strided_slice %303 {offsets = [0, 64], sizes = [4, 32], strides = [1, 1]} : vector<4x128xf32> to vector<4x32xf32>
    %308 = arith.mulf %305, %271 : vector<4x32xf32>
    %309 = arith.mulf %304, %307 : vector<4x32xf32>
    %310 = arith.addf %308, %309 : vector<4x32xf32>
    %311 = math.tanh %310 : vector<4x32xf32>
    %312 = arith.mulf %306, %311 : vector<4x32xf32>
    %cst_55 = arith.constant dense<0.000000e+00> : vector<4x256xf32>
    %313 = tpu.matmul %294, %7, %cst_55 {dimension_numbers = #tpu.dot_dimension_numbers<[1], [0], [0], [1], [0, 0, 1, 1], [], []>} : vector<4x32xf32>, vector<32x256xf32>, vector<4x256xf32> -> vector<4x256xf32>
    %cst_56 = arith.constant dense<0.000000e+00> : vector<4x256xf32>
    %314 = tpu.matmul %312, %9, %cst_56 {dimension_numbers = #tpu.dot_dimension_numbers<[1], [0], [0], [1], [0, 0, 1, 1], [], []>} : vector<4x32xf32>, vector<32x256xf32>, vector<4x256xf32> -> vector<4x256xf32>
    %315 = arith.addf %313, %314 : vector<4x256xf32>
    %316 = vector.extract_strided_slice %315 {offsets = [0, 128], sizes = [4, 128], strides = [1, 1]} : vector<4x256xf32> to vector<4x128xf32>
    %317 = vector.broadcast %10 : vector<1x128xf32> to vector<4x128xf32>
    %318 = arith.addf %316, %317 : vector<4x128xf32>
    %319 = arith.negf %318 : vector<4x128xf32>
    %320 = math.exp %319 : vector<4x128xf32>
    %cst_57 = arith.constant 1.000000e+00 : f32
    %321 = vector.broadcast %cst_57 : f32 to vector<4x128xf32>
    %322 = arith.addf %321, %320 : vector<4x128xf32>
    %323 = arith.divf %321, %322 : vector<4x128xf32>
    %324 = math.tanh %318 : vector<4x128xf32>
    %325 = vector.extract_strided_slice %323 {offsets = [0, 0], sizes = [4, 32], strides = [1, 1]} : vector<4x128xf32> to vector<4x32xf32>
    %326 = vector.extract_strided_slice %323 {offsets = [0, 32], sizes = [4, 32], strides = [1, 1]} : vector<4x128xf32> to vector<4x32xf32>
    %327 = vector.extract_strided_slice %323 {offsets = [0, 96], sizes = [4, 32], strides = [1, 1]} : vector<4x128xf32> to vector<4x32xf32>
    %328 = vector.extract_strided_slice %324 {offsets = [0, 64], sizes = [4, 32], strides = [1, 1]} : vector<4x128xf32> to vector<4x32xf32>
    %329 = arith.mulf %326, %310 : vector<4x32xf32>
    %330 = arith.mulf %325, %328 : vector<4x32xf32>
    %331 = arith.addf %329, %330 : vector<4x32xf32>
    %332 = math.tanh %331 : vector<4x32xf32>
    %333 = arith.mulf %327, %332 : vector<4x32xf32>
    %c0_58 = arith.constant 0 : index
    %c0_59 = arith.constant 0 : index
    %c0_60 = arith.constant 0 : index
    %334 = vector.load %arg10[%c0_58, %c0_59, %c0_60] : memref<4x4x32xf32, #tpu.memory_space<vmem>>, vector<1x4x32xf32>
    %335 = vector.shape_cast %334 : vector<1x4x32xf32> to vector<4x32xf32>
    %336 = vector.shape_cast %294 : vector<4x32xf32> to vector<1x4x32xf32>
    tpu.vector_store %arg10[%c0_58, %c0_59, %c0_60], %336 {strides = array<i32>} : memref<4x4x32xf32, #tpu.memory_space<vmem>>, vector<1x4x32xf32>,
    %c2 = arith.constant 2 : index
    %c0_61 = arith.constant 0 : index
    %c0_62 = arith.constant 0 : index
    %337 = vector.load %arg10[%c2, %c0_61, %c0_62] : memref<4x4x32xf32, #tpu.memory_space<vmem>>, vector<1x4x32xf32>
    %338 = vector.shape_cast %337 : vector<1x4x32xf32> to vector<4x32xf32>
    %339 = vector.shape_cast %292 : vector<4x32xf32> to vector<1x4x32xf32>
    tpu.vector_store %arg10[%c2, %c0_61, %c0_62], %339 {strides = array<i32>} : memref<4x4x32xf32, #tpu.memory_space<vmem>>, vector<1x4x32xf32>,
    %c1_63 = arith.constant 1 : index
    %c0_64 = arith.constant 0 : index
    %c0_65 = arith.constant 0 : index
    %340 = vector.load %arg10[%c1_63, %c0_64, %c0_65] : memref<4x4x32xf32, #tpu.memory_space<vmem>>, vector<1x4x32xf32>
    %341 = vector.shape_cast %340 : vector<1x4x32xf32> to vector<4x32xf32>
    %342 = vector.shape_cast %333 : vector<4x32xf32> to vector<1x4x32xf32>
    tpu.vector_store %arg10[%c1_63, %c0_64, %c0_65], %342 {strides = array<i32>} : memref<4x4x32xf32, #tpu.memory_space<vmem>>, vector<1x4x32xf32>,
    %c3 = arith.constant 3 : index
    %c0_66 = arith.constant 0 : index
    %c0_67 = arith.constant 0 : index
    %343 = vector.load %arg10[%c3, %c0_66, %c0_67] : memref<4x4x32xf32, #tpu.memory_space<vmem>>, vector<1x4x32xf32>
    %344 = vector.shape_cast %343 : vector<1x4x32xf32> to vector<4x32xf32>
    %345 = vector.shape_cast %331 : vector<4x32xf32> to vector<1x4x32xf32>
    tpu.vector_store %arg10[%c3, %c0_66, %c0_67], %345 {strides = array<i32>} : memref<4x4x32xf32, #tpu.memory_space<vmem>>, vector<1x4x32xf32>,
    %c0_68 = arith.constant 0 : index
    %c0_69 = arith.constant 0 : index
    %346 = vector.load %arg7[%c0_68, %c0_69] : memref<32x2xf32, #tpu.memory_space<vmem>>, vector<32x2xf32>
    %cst_70 = arith.constant dense<0.000000e+00> : vector<4x2xf32>
    %347 = tpu.matmul %333, %346, %cst_70 {dimension_numbers = #tpu.dot_dimension_numbers<[1], [0], [0], [1], [0, 0, 1, 1], [], []>} : vector<4x32xf32>, vector<32x2xf32>, vector<4x2xf32> -> vector<4x2xf32>
    %c0_71 = arith.constant 0 : index
    %c0_72 = arith.constant 0 : index
    %348 = vector.load %arg8[%c0_71, %c0_72] : memref<1x2xf32, #tpu.memory_space<vmem>>, vector<1x2xf32>
    %349 = vector.broadcast %348 : vector<1x2xf32> to vector<4x2xf32>
    %350 = arith.addf %347, %349 : vector<4x2xf32>
    %c0_73 = arith.constant 0 : index
    %c0_74 = arith.constant 0 : index
    %351 = vector.load %arg9[%c0_73, %c0_74] : memref<4x2xf32, #tpu.memory_space<vmem>>, vector<4x2xf32>
    tpu.vector_store %arg9[%c0_73, %c0_74], %350 {strides = array<i32>} : memref<4x2xf32, #tpu.memory_space<vmem>>, vector<4x2xf32>,
    return
  }
}

</mosaic_0001>

<llo_original>
// kernel: pytorch_lstm_forward.1
$region0: #{pytorch_lstm_forward.1}
  #allocation0 [shape = 'u32[]', space=smem, size = 0x4, offset = 0x4, fixed_abs, tag = 'smem constant byte address 0x4 - core index']
  #allocation1 [shape = 'u32[72,128]{1,0:T(1,128)}', space=vmem, size = 0x9000, scoped, tag = 'internal scratch']
  %s0 = inlined_call_operand.vmem [shape: f32[32,8], index: 0, kind: input, shape index: {}]
  %s1 = inlined_call_operand.hbm [shape: f32[2,4,32], index: 1, kind: input, shape index: {}]
  %s2 = inlined_call_operand.hbm [shape: f32[2,4,32], index: 2, kind: input, shape index: {}]
  %s3 = inlined_call_operand.hbm [shape: f32[8,128], index: 3, kind: input, shape index: {}]
  %s4 = inlined_call_operand.vmem [shape: f32[1,128], index: 4, kind: input, shape index: {}]
  %s5 = inlined_call_operand.hbm [shape: f32[2,32,256], index: 5, kind: input, shape index: {}]
  %s6 = inlined_call_operand.vmem [shape: f32[1,128], index: 6, kind: input, shape index: {}]
  %s7 = inlined_call_operand.vmem [shape: f32[32,2], index: 7, kind: input, shape index: {}]
  %s8 = inlined_call_operand.vmem [shape: f32[1,2], index: 8, kind: input, shape index: {}]
  %s9 = inlined_call_operand.vmem [shape: f32[4,2], index: 9, kind: output, shape index: {0}]
  %s10 = inlined_call_operand.vmem [shape: f32[4,4,32], index: 10, kind: output, shape index: {1}]
  %11 = xla_tuple %s9, %s10
  %s12 = sld [smem:[#allocation0]]
  $region70: #{pytorch_lstm_forward.1} parent=0
    _
  %s14 = ssub.s32 1, %s12
  %s15 = scalar_select 0, %s14, %s12
  $region1: #{pytorch_lstm_forward.1} parent=0
    #allocation2 [shape = 'u8[4096]{0}', space=vmem, size = 0x1000, scoped, tag = 'input window, operand 1, single buffered']
    #allocation3 [shape = 's32[1]{0}', space=sflag, size = 0x4, scoped, tag = 'scoped memory for pytorch_lstm_forward.1']
    #allocation4 [shape = 'u8[4096]{0}', space=vmem, size = 0x1000, scoped, tag = 'input window, operand 2, single buffered']
    #allocation5 [shape = 's32[1]{0}', space=sflag, size = 0x4, scoped, tag = 'scoped memory for pytorch_lstm_forward.1']
    #allocation6 [shape = 'u8[4096]{0}', space=vmem, size = 0x1000, scoped, tag = 'input window, operand 3, single buffered']
    #allocation7 [shape = 'u8[65536]{0}', space=vmem, size = 0x10000, scoped, tag = 'input window, operand 5, single buffered']
    #allocation8 [shape = 's32[1]{0}', space=sflag, size = 0x4, scoped, tag = 'scoped memory for pytorch_lstm_forward.1']
    %16 = vsyncpa [#allocation3], 0
    %17 = vsyncpa [#allocation5], 0
    %18 = vsyncpa [#allocation8], 0
    // Predicated region
    $region2: #{pytorch_lstm_forward.1} parent=1 // pred_check
      _
    $region3: #{pytorch_lstm_forward.1} parent=1 // pred_check_branch
      %20 = sbr.rel (0) target = $region5
    $region4: #{pytorch_lstm_forward.1} parent=1 // pred_region
      _
    $region5: #{pytorch_lstm_forward.1} parent=1 // pred_fallthru
      _
    // Predicated region
    $region6: #{pytorch_lstm_forward.1} parent=1 // pred_check
      _
    $region7: #{pytorch_lstm_forward.1} parent=1 // pred_check_branch
      %22 = sbr.rel (0) target = $region9
    $region8: #{pytorch_lstm_forward.1} parent=1 // pred_region
      %24 = vsyncadd [#allocation3], 0
      %s25 = sshll.u32 %s1, 4
      %s26 = int_to_ptr.hbm [resolvable:$true] %s25
      %s27 = sshll.u32 [#allocation2], 4
      %s28 = int_to_ptr.vmem [resolvable:$true] %s27
      %33 = dma.hbm_to_vmem [thread:$0]  %s26, 128, %s28, [#allocation3], 64, 64, 4
    $region9: #{pytorch_lstm_forward.1} parent=1 // pred_fallthru
      _
    // Predicated region
    $region10: #{pytorch_lstm_forward.1} parent=1 // pred_check
      _
    $region11: #{pytorch_lstm_forward.1} parent=1 // pred_check_branch
      %35 = sbr.rel (0) target = $region13
    $region12: #{pytorch_lstm_forward.1} parent=1 // pred_region
      %37 = vsyncadd [#allocation5], 0
      %s38 = sshll.u32 %s2, 4
      %s39 = int_to_ptr.hbm [resolvable:$true] %s38
      %s40 = sshll.u32 [#allocation4], 4
      %s41 = int_to_ptr.vmem [resolvable:$true] %s40
      %46 = dma.hbm_to_vmem [thread:$0]  %s39, 128, %s41, [#allocation5], 64, 64, 4
    $region13: #{pytorch_lstm_forward.1} parent=1 // pred_fallthru
      _
    // Predicated region
    $region14: #{pytorch_lstm_forward.1} parent=1 // pred_check
      _
    $region15: #{pytorch_lstm_forward.1} parent=1 // pred_check_branch
      %48 = sbr.rel (0) target = $region17
    $region16: #{pytorch_lstm_forward.1} parent=1 // pred_region
      %50 = vsyncadd [#allocation5], 0
      %s52 = sshll.u32 %s3, 4
      %s53 = int_to_ptr.hbm [resolvable:$true] %s52
      %s54 = sshll.u32 [#allocation6], 4
      %s55 = int_to_ptr.vmem [resolvable:$true] %s54
      %57 = dma.hbm_to_vmem [thread:$0]  %s53, 128, %s55, [#allocation5]
    $region17: #{pytorch_lstm_forward.1} parent=1 // pred_fallthru
      _
    // Predicated region
    $region18: #{pytorch_lstm_forward.1} parent=1 // pred_check
      _
    $region19: #{pytorch_lstm_forward.1} parent=1 // pred_check_branch
      %59 = sbr.rel (0) target = $region21
    $region20: #{pytorch_lstm_forward.1} parent=1 // pred_region
      _
    $region21: #{pytorch_lstm_forward.1} parent=1 // pred_fallthru
      _
    // Predicated region
    $region22: #{pytorch_lstm_forward.1} parent=1 // pred_check
      _
    $region23: #{pytorch_lstm_forward.1} parent=1 // pred_check_branch
      %61 = sbr.rel (0) target = $region25
    $region24: #{pytorch_lstm_forward.1} parent=1 // pred_region
      %63 = vsyncadd [#allocation8], 0
      %s64 = sshll.u32 %s5, 4
      %s65 = int_to_ptr.hbm [resolvable:$true] %s64
      %s66 = sshll.u32 [#allocation7], 4
      %s67 = int_to_ptr.vmem [resolvable:$true] %s66
      %72 = dma.hbm_to_vmem [thread:$0]  %s65, 2048, %s67, [#allocation8], 256, 256, 16
    $region25: #{pytorch_lstm_forward.1} parent=1 // pred_fallthru
      _
    // Predicated region
    $region26: #{pytorch_lstm_forward.1} parent=1 // pred_check
      _
    $region27: #{pytorch_lstm_forward.1} parent=1 // pred_check_branch
      %74 = sbr.rel (0) target = $region29
    $region28: #{pytorch_lstm_forward.1} parent=1 // pred_region
      _
    $region29: #{pytorch_lstm_forward.1} parent=1 // pred_fallthru
      _
    // Predicated region
    $region30: #{pytorch_lstm_forward.1} parent=1 // pred_check
      _
    $region31: #{pytorch_lstm_forward.1} parent=1 // pred_check_branch
      %76 = sbr.rel (0) target = $region33
    $region32: #{pytorch_lstm_forward.1} parent=1 // pred_region
      _
    $region33: #{pytorch_lstm_forward.1} parent=1 // pred_fallthru
      _
    // Predicated region
    $region34: #{pytorch_lstm_forward.1} parent=1 // pred_check
      _
    $region35: #{pytorch_lstm_forward.1} parent=1 // pred_check_branch
      %78 = sbr.rel (0) target = $region37
    $region36: #{pytorch_lstm_forward.1} parent=1 // pred_region
      _
    $region37: #{pytorch_lstm_forward.1} parent=1 // pred_fallthru
      _
    // Predicated region
    $region38: #{pytorch_lstm_forward.1} parent=1 // pred_check
      _
    $region39: #{pytorch_lstm_forward.1} parent=1 // pred_check_branch
      %80 = sbr.rel (0) target = $region41
    $region40: #{pytorch_lstm_forward.1} parent=1 // pred_region
      %82 = dma.done [#allocation3], 128
    $region41: #{pytorch_lstm_forward.1} parent=1 // pred_fallthru
      _
    // Predicated region
    $region42: #{pytorch_lstm_forward.1} parent=1 // pred_check
      _
    $region43: #{pytorch_lstm_forward.1} parent=1 // pred_check_branch
      %84 = sbr.rel (0) target = $region45
    $region44: #{pytorch_lstm_forward.1} parent=1 // pred_region
      %86 = dma.done [#allocation5], 128
    $region45: #{pytorch_lstm_forward.1} parent=1 // pred_fallthru
      _
    // Predicated region
    $region46: #{pytorch_lstm_forward.1} parent=1 // pred_check
      _
    $region47: #{pytorch_lstm_forward.1} parent=1 // pred_check_branch
      %88 = sbr.rel (0) target = $region49
    $region48: #{pytorch_lstm_forward.1} parent=1 // pred_region
      %90 = dma.done [#allocation5], 128
    $region49: #{pytorch_lstm_forward.1} parent=1 // pred_fallthru
      _
    // Predicated region
    $region50: #{pytorch_lstm_forward.1} parent=1 // pred_check
      _
    $region51: #{pytorch_lstm_forward.1} parent=1 // pred_check_branch
      %92 = sbr.rel (0) target = $region53
    $region52: #{pytorch_lstm_forward.1} parent=1 // pred_region
      %94 = dma.done [#allocation8], 2048
    $region53: #{pytorch_lstm_forward.1} parent=1 // pred_fallthru
      _
    %v95 = vld [vmem:[%s0] sm:$0xff]
    %v96 = vld [vmem:[%s0 + $0x8] sm:$0xff]
    %v97 = vld [vmem:[%s0 + $0x10] sm:$0xff]
    %v98 = vld [vmem:[%s0 + $0x18] sm:$0xff]
    %v99 = vld [vmem:[#allocation6] sm:$0xff]
    %v100 = vld [vmem:[%s4] sm:$0x1]
    %v102 = vperm.slane %v100, 0
    %vm104 = vcmask 64512
    %v106 = vsel %vm104, %v95, 0
    %v109 = vsel %vm104, %v96, 0
    %v112 = vsel %vm104, %v97, 0
    %v115 = vsel %vm104, %v98, 0
    %117 = vmatpush.msra.mxu0 0.0
    %118 = vmatpush.msra.mxu0 0.0
    %119 = vmatpush.msra.mxu0 0.0
    %120 = vmatpush.msra.mxu0 0.0
    %121 = vmatpush.msra.mxu0 0.0
    %122 = vmatpush.msra.mxu0 0.0
    %123 = vmatpush.msra.mxu0 0.0
    %124 = vmatpush.msra.mxu0 0.0
    %125 = vmatpush.msra.mxu0 0.0
    %126 = vmatpush.msra.mxu0 0.0
    %127 = vmatpush.msra.mxu0 0.0
    %128 = vmatpush.msra.mxu0 0.0
    %129 = vmatpush.msra.mxu0 0.0
    %130 = vmatpush.msra.mxu0 0.0
    %131 = vmatpush.msra.mxu0 0.0
    %132 = vmatpush.msra.mxu0 %v99
    %133 = vmatmul.f32.gmra.mxu0 %v106
    %v134 = vpop.f32.mrf.mxu0
    %v135 = vadd.f32 %v102, %v134
    %136 = vmatmul.f32.gmra.mxu0 %v109
    %v137 = vpop.f32.mrf.mxu0
    %v138 = vadd.f32 %v102, %v137
    %139 = vmatmul.f32.gmra.mxu0 %v112
    %v140 = vpop.f32.mrf.mxu0
    %v141 = vadd.f32 %v102, %v140
    %142 = vmatmul.f32.gmra.mxu0 %v115
    %v143 = vpop.f32.mrf.mxu0
    %v144 = vadd.f32 %v102, %v143
    %145 = vdwg.mxu0
    %v146 = vld [vmem:[#allocation7] sm:$0xff]
    %v147 = vld [vmem:[#allocation7 + $0x8] sm:$0xff]
    %v148 = vld [vmem:[#allocation7 + $0x10] sm:$0xff]
    %v149 = vld [vmem:[#allocation7 + $0x18] sm:$0xff]
    %v150 = vld [vmem:[#allocation7 + $0x20] sm:$0xff]
    %v151 = vld [vmem:[#allocation7 + $0x28] sm:$0xff]
    %v152 = vld [vmem:[#allocation7 + $0x30] sm:$0xff]
    %v153 = vld [vmem:[#allocation7 + $0x38] sm:$0xff]
    %s154 = scalar_lea.vmem [#allocation7], 64
    %v155 = vld [vmem:[%s154] sm:$0xff]
    %v156 = vld [vmem:[%s154 + $0x8] sm:$0xff]
    %v157 = vld [vmem:[%s154 + $0x10] sm:$0xff]
    %v158 = vld [vmem:[%s154 + $0x18] sm:$0xff]
    %v159 = vld [vmem:[%s154 + $0x20] sm:$0xff]
    %v160 = vld [vmem:[%s154 + $0x28] sm:$0xff]
    %v161 = vld [vmem:[%s154 + $0x30] sm:$0xff]
    %v162 = vld [vmem:[%s154 + $0x38] sm:$0xff]
    %v163 = vld [vmem:[%s6] sm:$0x1]
    %v164 = vld [vmem:[#allocation2] sm:$0xf]
    %s165 = scalar_lea.vmem [#allocation2], 4
    %v166 = vld [vmem:[%s165] sm:$0xf]
    %v167 = vld [vmem:[#allocation4] sm:$0xf]
    %s168 = scalar_lea.vmem [#allocation4], 4
    %v169 = vld [vmem:[%s168] sm:$0xf]
    %vm170 = vcmask 261120
    %v172 = vsel %vm170, %v166, 0
    %174 = vmatpush.msra.mxu0 0.0
    %175 = vmatpush.msra.mxu0 0.0
    %176 = vmatpush.msra.mxu0 0.0
    %177 = vmatpush.msra.mxu0 0.0
    %178 = vmatpush.msra.mxu0 0.0
    %179 = vmatpush.msra.mxu0 0.0
    %180 = vmatpush.msra.mxu0 0.0
    %181 = vmatpush.msra.mxu0 0.0
    %182 = vmatpush.msra.mxu0 0.0
    %183 = vmatpush.msra.mxu0 0.0
    %184 = vmatpush.msra.mxu0 0.0
    %185 = vmatpush.msra.mxu0 0.0
    %186 = vmatpush.msra.mxu0 %v161
    %187 = vmatpush.msra.mxu0 %v159
    %188 = vmatpush.msra.mxu0 %v157
    %189 = vmatpush.msra.mxu0 %v155
    %190 = vmatmul.f32.gmra.mxu0 %v172
    %v191 = vpop.f32.mrf.mxu0
    %v192 = vadd.f32 0.0, %v191
    %193 = vdwg.mxu0
    %194 = vmatpush.msra.mxu0 0.0
    %195 = vmatpush.msra.mxu0 0.0
    %196 = vmatpush.msra.mxu0 0.0
    %197 = vmatpush.msra.mxu0 0.0
    %198 = vmatpush.msra.mxu0 0.0
    %199 = vmatpush.msra.mxu0 0.0
    %200 = vmatpush.msra.mxu0 0.0
    %201 = vmatpush.msra.mxu0 0.0
    %202 = vmatpush.msra.mxu0 0.0
    %203 = vmatpush.msra.mxu0 0.0
    %204 = vmatpush.msra.mxu0 0.0
    %205 = vmatpush.msra.mxu0 0.0
    %206 = vmatpush.msra.mxu0 %v162
    %207 = vmatpush.msra.mxu0 %v160
    %208 = vmatpush.msra.mxu0 %v158
    %209 = vmatpush.msra.mxu0 %v156
    %210 = vmatmul.f32.gmra.mxu0 %v172
    %v211 = vpop.f32.mrf.mxu0
    %v212 = vadd.f32 0.0, %v211
    %213 = vdwg.mxu0
    %v215 = vsel %vm170, %v164, 0
    %217 = vmatpush.msra.mxu0 0.0
    %218 = vmatpush.msra.mxu0 0.0
    %219 = vmatpush.msra.mxu0 0.0
    %220 = vmatpush.msra.mxu0 0.0
    %221 = vmatpush.msra.mxu0 0.0
    %222 = vmatpush.msra.mxu0 0.0
    %223 = vmatpush.msra.mxu0 0.0
    %224 = vmatpush.msra.mxu0 0.0
    %225 = vmatpush.msra.mxu0 0.0
    %226 = vmatpush.msra.mxu0 0.0
    %227 = vmatpush.msra.mxu0 0.0
    %228 = vmatpush.msra.mxu0 0.0
    %229 = vmatpush.msra.mxu0 %v152
    %230 = vmatpush.msra.mxu0 %v150
    %231 = vmatpush.msra.mxu0 %v148
    %232 = vmatpush.msra.mxu0 %v146
    %233 = vmatmul.f32.gmra.mxu0 %v215
    %v234 = vpop.f32.mrf.mxu0
    %v235 = vadd.f32 %v192, %v234
    %236 = vdwg.mxu0
    %v237 = vadd.f32 %v235, %v135
    %v238 = vxor.u32 %v237, 2147483648
    %v239 = vmul.f32 %v238, 1.442695
    %v240 = vpow.pop %v239
    %v241 = vadd.f32 %v240, 1.0
    %v242 = vrcp.pop %v241
    %v243 = vmul.f32 %v241, %v242
    %v244 = vsub.f32 1.0, %v243
    %v245 = vmul.f32 %v242, %v244
    %v246 = vadd.f32 %v242, %v245
    %vm247 = vweird.f32 %v241
    %vm248 = vweird.f32 %v242
    %vm249 = vmor %vm247, %vm248
    %v250 = vsel %vm249, %v242, %v246
    %v251 = vand.u32 2147483647, %v241
    %vm252 = vcmp.eq.f32.partialorder %v251, 8.507059e+37
    %v253 = vand.u32 %v241, 2147483648
    %v254 = vor.u32 1.1754944e-38, %v253
    %v255 = vsel %vm252, %v254, %v250
    %v256 = vmul.f32 1.0, %v255
    %v257 = vtanh.pop %v237
    %259 = vrot.lane.b32.xlu0 %v167, 32
    %v260 = vpop.permute.xlu0 %259
    %v262 = vmul.f32 %v256, %v260
    %264 = vrot.lane.b32.xlu0 %v257, 64
    %v265 = vpop.permute.xlu0 %264
    %v267 = vmul.f32 %v256, %v265
    %269 = vrot.lane.b32.xlu0 %v267, 32
    %v270 = vpop.permute.xlu0 %269
    %v272 = vadd.f32 %v262, %v270
    %v273 = vtanh.pop %v272
    %275 = vrot.lane.b32.xlu0 %v273, 64
    %v276 = vpop.permute.xlu0 %275
    %v278 = vmul.f32 %v256, %v276
    %280 = vrot.lane.b32.xlu0 %v278, 32
    %v281 = vpop.permute.xlu0 %280
    %v282 = vsel %vm170, %v281, 0
    %284 = vmatpush.msra.mxu0 0.0
    %285 = vmatpush.msra.mxu0 0.0
    %286 = vmatpush.msra.mxu0 0.0
    %287 = vmatpush.msra.mxu0 0.0
    %288 = vmatpush.msra.mxu0 0.0
    %289 = vmatpush.msra.mxu0 0.0
    %290 = vmatpush.msra.mxu0 0.0
    %291 = vmatpush.msra.mxu0 0.0
    %292 = vmatpush.msra.mxu0 0.0
    %293 = vmatpush.msra.mxu0 0.0
    %294 = vmatpush.msra.mxu0 0.0
    %295 = vmatpush.msra.mxu0 0.0
    %296 = vmatpush.msra.mxu0 %v152
    %297 = vmatpush.msra.mxu0 %v150
    %298 = vmatpush.msra.mxu0 %v148
    %299 = vmatpush.msra.mxu0 %v146
    %300 = vmatmul.f32.gmra.mxu0 %v282
    %v301 = vpop.f32.mrf.mxu0
    %v302 = vadd.f32 %v192, %v301
    %303 = vdwg.mxu0
    %304 = vmatpush.msra.mxu0 0.0
    %305 = vmatpush.msra.mxu0 0.0
    %306 = vmatpush.msra.mxu0 0.0
    %307 = vmatpush.msra.mxu0 0.0
    %308 = vmatpush.msra.mxu0 0.0
    %309 = vmatpush.msra.mxu0 0.0
    %310 = vmatpush.msra.mxu0 0.0
    %311 = vmatpush.msra.mxu0 0.0
    %312 = vmatpush.msra.mxu0 0.0
    %313 = vmatpush.msra.mxu0 0.0
    %314 = vmatpush.msra.mxu0 0.0
    %315 = vmatpush.msra.mxu0 0.0
    %316 = vmatpush.msra.mxu0 %v153
    %317 = vmatpush.msra.mxu0 %v151
    %318 = vmatpush.msra.mxu0 %v149
    %319 = vmatpush.msra.mxu0 %v147
    %320 = vmatmul.f32.gmra.mxu0 %v282
    %v321 = vpop.f32.mrf.mxu0
    %v322 = vadd.f32 %v212, %v321
    %323 = vdwg.mxu0
    %v325 = vrot.slane %v135, 4
    %v327 = vadd.f32 %v302, %v325
    %v328 = vxor.u32 %v327, 2147483648
    %v329 = vmul.f32 %v328, 1.442695
    %v330 = vpow.pop %v329
    %v331 = vadd.f32 %v330, 1.0
    %v332 = vrcp.pop %v331
    %v333 = vmul.f32 %v331, %v332
    %v334 = vsub.f32 1.0, %v333
    %v335 = vmul.f32 %v332, %v334
    %v336 = vadd.f32 %v332, %v335
    %vm337 = vweird.f32 %v331
    %vm338 = vweird.f32 %v332
    %vm339 = vmor %vm337, %vm338
    %v340 = vsel %vm339, %v332, %v336
    %v341 = vand.u32 2147483647, %v331
    %vm342 = vcmp.eq.f32.partialorder %v341, 8.507059e+37
    %v343 = vand.u32 %v331, 2147483648
    %v344 = vor.u32 1.1754944e-38, %v343
    %v345 = vsel %vm342, %v344, %v340
    %v346 = vmul.f32 1.0, %v345
    %v347 = vtanh.pop %v327
    %v348 = vmul.f32 %v346, %v272
    %350 = vrot.lane.b32.xlu0 %v347, 64
    %v351 = vpop.permute.xlu0 %350
    %v353 = vmul.f32 %v346, %v351
    %355 = vrot.lane.b32.xlu0 %v353, 32
    %v356 = vpop.permute.xlu0 %355
    %v358 = vadd.f32 %v348, %v356
    %v359 = vtanh.pop %v358
    %361 = vrot.lane.b32.xlu0 %v359, 64
    %v362 = vpop.permute.xlu0 %361
    %v364 = vmul.f32 %v346, %v362
    %v366 = vperm.slane %v163, 0
    %v368 = vadd.f32 %v322, %v366
    %v369 = vxor.u32 %v368, 2147483648
    %v370 = vmul.f32 %v369, 1.442695
    %v371 = vpow.pop %v370
    %v372 = vadd.f32 %v371, 1.0
    %v373 = vrcp.pop %v372
    %v374 = vmul.f32 %v372, %v373
    %v375 = vsub.f32 1.0, %v374
    %v376 = vmul.f32 %v373, %v375
    %v377 = vadd.f32 %v373, %v376
    %vm378 = vweird.f32 %v372
    %vm379 = vweird.f32 %v373
    %vm380 = vmor %vm378, %vm379
    %v381 = vsel %vm380, %v373, %v377
    %v382 = vand.u32 2147483647, %v372
    %vm383 = vcmp.eq.f32.partialorder %v382, 8.507059e+37
    %v384 = vand.u32 %v372, 2147483648
    %v385 = vor.u32 1.1754944e-38, %v384
    %v386 = vsel %vm383, %v385, %v381
    %v387 = vmul.f32 1.0, %v386
    %v388 = vtanh.pop %v368
    %390 = vrot.lane.b32.xlu0 %v169, 32
    %v391 = vpop.permute.xlu0 %390
    %v393 = vmul.f32 %v387, %v391
    %395 = vrot.lane.b32.xlu0 %v388, 64
    %v396 = vpop.permute.xlu0 %395
    %v398 = vmul.f32 %v387, %v396
    %400 = vrot.lane.b32.xlu0 %v398, 32
    %v401 = vpop.permute.xlu0 %400
    %v403 = vadd.f32 %v393, %v401
    %v404 = vtanh.pop %v403
    %406 = vrot.lane.b32.xlu0 %v404, 64
    %v407 = vpop.permute.xlu0 %406
    %v409 = vmul.f32 %v387, %v407
    %411 = vrot.lane.b32.xlu0 %v409, 32
    %v412 = vpop.permute.xlu0 %411
    %v413 = vsel %vm170, %v412, 0
    %415 = vmatpush.msra.mxu0 0.0
    %416 = vmatpush.msra.mxu0 0.0
    %417 = vmatpush.msra.mxu0 0.0
    %418 = vmatpush.msra.mxu0 0.0
    %419 = vmatpush.msra.mxu0 0.0
    %420 = vmatpush.msra.mxu0 0.0
    %421 = vmatpush.msra.mxu0 0.0
    %422 = vmatpush.msra.mxu0 0.0
    %423 = vmatpush.msra.mxu0 0.0
    %424 = vmatpush.msra.mxu0 0.0
    %425 = vmatpush.msra.mxu0 0.0
    %426 = vmatpush.msra.mxu0 0.0
    %427 = vmatpush.msra.mxu0 %v161
    %428 = vmatpush.msra.mxu0 %v159
    %429 = vmatpush.msra.mxu0 %v157
    %430 = vmatpush.msra.mxu0 %v155
    %431 = vmatmul.f32.gmra.mxu0 %v413
    %v432 = vpop.f32.mrf.mxu0
    %v433 = vadd.f32 0.0, %v432
    %434 = vdwg.mxu0
    %435 = vmatpush.msra.mxu0 0.0
    %436 = vmatpush.msra.mxu0 0.0
    %437 = vmatpush.msra.mxu0 0.0
    %438 = vmatpush.msra.mxu0 0.0
    %439 = vmatpush.msra.mxu0 0.0
    %440 = vmatpush.msra.mxu0 0.0
    %441 = vmatpush.msra.mxu0 0.0
    %442 = vmatpush.msra.mxu0 0.0
    %443 = vmatpush.msra.mxu0 0.0
    %444 = vmatpush.msra.mxu0 0.0
    %445 = vmatpush.msra.mxu0 0.0
    %446 = vmatpush.msra.mxu0 0.0
    %447 = vmatpush.msra.mxu0 %v162
    %448 = vmatpush.msra.mxu0 %v160
    %449 = vmatpush.msra.mxu0 %v158
    %450 = vmatpush.msra.mxu0 %v156
    %451 = vmatmul.f32.gmra.mxu0 %v413
    %v452 = vpop.f32.mrf.mxu0
    %v453 = vadd.f32 0.0, %v452
    %454 = vdwg.mxu0
    %456 = vrot.lane.b32.xlu0 %v364, 32
    %v457 = vpop.permute.xlu0 %456
    %v458 = vsel %vm170, %v457, 0
    %460 = vmatpush.msra.mxu0 0.0
    %461 = vmatpush.msra.mxu0 0.0
    %462 = vmatpush.msra.mxu0 0.0
    %463 = vmatpush.msra.mxu0 0.0
    %464 = vmatpush.msra.mxu0 0.0
    %465 = vmatpush.msra.mxu0 0.0
    %466 = vmatpush.msra.mxu0 0.0
    %467 = vmatpush.msra.mxu0 0.0
    %468 = vmatpush.msra.mxu0 0.0
    %469 = vmatpush.msra.mxu0 0.0
    %470 = vmatpush.msra.mxu0 0.0
    %471 = vmatpush.msra.mxu0 0.0
    %472 = vmatpush.msra.mxu0 %v152
    %473 = vmatpush.msra.mxu0 %v150
    %474 = vmatpush.msra.mxu0 %v148
    %475 = vmatpush.msra.mxu0 %v146
    %476 = vmatmul.f32.gmra.mxu0 %v458
    %v477 = vpop.f32.mrf.mxu0
    %v478 = vadd.f32 %v433, %v477
    %479 = vdwg.mxu0
    %480 = vmatpush.msra.mxu0 0.0
    %481 = vmatpush.msra.mxu0 0.0
    %482 = vmatpush.msra.mxu0 0.0
    %483 = vmatpush.msra.mxu0 0.0
    %484 = vmatpush.msra.mxu0 0.0
    %485 = vmatpush.msra.mxu0 0.0
    %486 = vmatpush.msra.mxu0 0.0
    %487 = vmatpush.msra.mxu0 0.0
    %488 = vmatpush.msra.mxu0 0.0
    %489 = vmatpush.msra.mxu0 0.0
    %490 = vmatpush.msra.mxu0 0.0
    %491 = vmatpush.msra.mxu0 0.0
    %492 = vmatpush.msra.mxu0 %v153
    %493 = vmatpush.msra.mxu0 %v151
    %494 = vmatpush.msra.mxu0 %v149
    %495 = vmatpush.msra.mxu0 %v147
    %496 = vmatmul.f32.gmra.mxu0 %v458
    %v497 = vpop.f32.mrf.mxu0
    %v498 = vadd.f32 %v453, %v497
    %499 = vdwg.mxu0
    %v500 = vadd.f32 %v478, %v138
    %v501 = vxor.u32 %v500, 2147483648
    %v502 = vmul.f32 %v501, 1.442695
    %v503 = vpow.pop %v502
    %v504 = vadd.f32 %v503, 1.0
    %v505 = vrcp.pop %v504
    %v506 = vmul.f32 %v504, %v505
    %v507 = vsub.f32 1.0, %v506
    %v508 = vmul.f32 %v505, %v507
    %v509 = vadd.f32 %v505, %v508
    %vm510 = vweird.f32 %v504
    %vm511 = vweird.f32 %v505
    %vm512 = vmor %vm510, %vm511
    %v513 = vsel %vm512, %v505, %v509
    %v514 = vand.u32 2147483647, %v504
    %vm515 = vcmp.eq.f32.partialorder %v514, 8.507059e+37
    %v516 = vand.u32 %v504, 2147483648
    %v517 = vor.u32 1.1754944e-38, %v516
    %v518 = vsel %vm515, %v517, %v513
    %v519 = vmul.f32 1.0, %v518
    %v520 = vtanh.pop %v500
    %v521 = vmul.f32 %v519, %v358
    %523 = vrot.lane.b32.xlu0 %v520, 64
    %v524 = vpop.permute.xlu0 %523
    %v526 = vmul.f32 %v519, %v524
    %528 = vrot.lane.b32.xlu0 %v526, 32
    %v529 = vpop.permute.xlu0 %528
    %v531 = vadd.f32 %v521, %v529
    %v532 = vtanh.pop %v531
    %534 = vrot.lane.b32.xlu0 %v532, 64
    %v535 = vpop.permute.xlu0 %534
    %v537 = vmul.f32 %v519, %v535
    %v538 = vadd.f32 %v498, %v366
    %v539 = vxor.u32 %v538, 2147483648
    %v540 = vmul.f32 %v539, 1.442695
    %v541 = vpow.pop %v540
    %v542 = vadd.f32 %v541, 1.0
    %v543 = vrcp.pop %v542
    %v544 = vmul.f32 %v542, %v543
    %v545 = vsub.f32 1.0, %v544
    %v546 = vmul.f32 %v543, %v545
    %v547 = vadd.f32 %v543, %v546
    %vm548 = vweird.f32 %v542
    %vm549 = vweird.f32 %v543
    %vm550 = vmor %vm548, %vm549
    %v551 = vsel %vm550, %v543, %v547
    %v552 = vand.u32 2147483647, %v542
    %vm553 = vcmp.eq.f32.partialorder %v552, 8.507059e+37
    %v554 = vand.u32 %v542, 2147483648
    %v555 = vor.u32 1.1754944e-38, %v554
    %v556 = vsel %vm553, %v555, %v551
    %v557 = vmul.f32 1.0, %v556
    %v558 = vtanh.pop %v538
    %v559 = vmul.f32 %v557, %v403
    %561 = vrot.lane.b32.xlu0 %v558, 64
    %v562 = vpop.permute.xlu0 %561
    %v564 = vmul.f32 %v557, %v562
    %566 = vrot.lane.b32.xlu0 %v564, 32
    %v567 = vpop.permute.xlu0 %566
    %v569 = vadd.f32 %v559, %v567
    %v570 = vtanh.pop %v569
    %572 = vrot.lane.b32.xlu0 %v570, 64
    %v573 = vpop.permute.xlu0 %572
    %v575 = vmul.f32 %v557, %v573
    %577 = vrot.lane.b32.xlu0 %v575, 32
    %v578 = vpop.permute.xlu0 %577
    %v579 = vsel %vm170, %v578, 0
    %581 = vmatpush.msra.mxu0 0.0
    %582 = vmatpush.msra.mxu0 0.0
    %583 = vmatpush.msra.mxu0 0.0
    %584 = vmatpush.msra.mxu0 0.0
    %585 = vmatpush.msra.mxu0 0.0
    %586 = vmatpush.msra.mxu0 0.0
    %587 = vmatpush.msra.mxu0 0.0
    %588 = vmatpush.msra.mxu0 0.0
    %589 = vmatpush.msra.mxu0 0.0
    %590 = vmatpush.msra.mxu0 0.0
    %591 = vmatpush.msra.mxu0 0.0
    %592 = vmatpush.msra.mxu0 0.0
    %593 = vmatpush.msra.mxu0 %v161
    %594 = vmatpush.msra.mxu0 %v159
    %595 = vmatpush.msra.mxu0 %v157
    %596 = vmatpush.msra.mxu0 %v155
    %597 = vmatmul.f32.gmra.mxu0 %v579
    %v598 = vpop.f32.mrf.mxu0
    %v599 = vadd.f32 0.0, %v598
    %600 = vdwg.mxu0
    %601 = vmatpush.msra.mxu0 0.0
    %602 = vmatpush.msra.mxu0 0.0
    %603 = vmatpush.msra.mxu0 0.0
    %604 = vmatpush.msra.mxu0 0.0
    %605 = vmatpush.msra.mxu0 0.0
    %606 = vmatpush.msra.mxu0 0.0
    %607 = vmatpush.msra.mxu0 0.0
    %608 = vmatpush.msra.mxu0 0.0
    %609 = vmatpush.msra.mxu0 0.0
    %610 = vmatpush.msra.mxu0 0.0
    %611 = vmatpush.msra.mxu0 0.0
    %612 = vmatpush.msra.mxu0 0.0
    %613 = vmatpush.msra.mxu0 %v162
    %614 = vmatpush.msra.mxu0 %v160
    %615 = vmatpush.msra.mxu0 %v158
    %616 = vmatpush.msra.mxu0 %v156
    %617 = vmatmul.f32.gmra.mxu0 %v579
    %v618 = vpop.f32.mrf.mxu0
    %v619 = vadd.f32 0.0, %v618
    %620 = vdwg.mxu0
    %622 = vrot.lane.b32.xlu0 %v537, 32
    %v623 = vpop.permute.xlu0 %622
    %v624 = vsel %vm170, %v623, 0
    %626 = vmatpush.msra.mxu0 0.0
    %627 = vmatpush.msra.mxu0 0.0
    %628 = vmatpush.msra.mxu0 0.0
    %629 = vmatpush.msra.mxu0 0.0
    %630 = vmatpush.msra.mxu0 0.0
    %631 = vmatpush.msra.mxu0 0.0
    %632 = vmatpush.msra.mxu0 0.0
    %633 = vmatpush.msra.mxu0 0.0
    %634 = vmatpush.msra.mxu0 0.0
    %635 = vmatpush.msra.mxu0 0.0
    %636 = vmatpush.msra.mxu0 0.0
    %637 = vmatpush.msra.mxu0 0.0
    %638 = vmatpush.msra.mxu0 %v152
    %639 = vmatpush.msra.mxu0 %v150
    %640 = vmatpush.msra.mxu0 %v148
    %641 = vmatpush.msra.mxu0 %v146
    %642 = vmatmul.f32.gmra.mxu0 %v624
    %v643 = vpop.f32.mrf.mxu0
    %v644 = vadd.f32 %v599, %v643
    %645 = vdwg.mxu0
    %646 = vmatpush.msra.mxu0 0.0
    %647 = vmatpush.msra.mxu0 0.0
    %648 = vmatpush.msra.mxu0 0.0
    %649 = vmatpush.msra.mxu0 0.0
    %650 = vmatpush.msra.mxu0 0.0
    %651 = vmatpush.msra.mxu0 0.0
    %652 = vmatpush.msra.mxu0 0.0
    %653 = vmatpush.msra.mxu0 0.0
    %654 = vmatpush.msra.mxu0 0.0
    %655 = vmatpush.msra.mxu0 0.0
    %656 = vmatpush.msra.mxu0 0.0
    %657 = vmatpush.msra.mxu0 0.0
    %658 = vmatpush.msra.mxu0 %v153
    %659 = vmatpush.msra.mxu0 %v151
    %660 = vmatpush.msra.mxu0 %v149
    %661 = vmatpush.msra.mxu0 %v147
    %662 = vmatmul.f32.gmra.mxu0 %v624
    %v663 = vpop.f32.mrf.mxu0
    %v664 = vadd.f32 %v619, %v663
    %665 = vdwg.mxu0
    %v667 = vrot.slane %v138, 4
    %v669 = vadd.f32 %v644, %v667
    %v670 = vxor.u32 %v669, 2147483648
    %v671 = vmul.f32 %v670, 1.442695
    %v672 = vpow.pop %v671
    %v673 = vadd.f32 %v672, 1.0
    %v674 = vrcp.pop %v673
    %v675 = vmul.f32 %v673, %v674
    %v676 = vsub.f32 1.0, %v675
    %v677 = vmul.f32 %v674, %v676
    %v678 = vadd.f32 %v674, %v677
    %vm679 = vweird.f32 %v673
    %vm680 = vweird.f32 %v674
    %vm681 = vmor %vm679, %vm680
    %v682 = vsel %vm681, %v674, %v678
    %v683 = vand.u32 2147483647, %v673
    %vm684 = vcmp.eq.f32.partialorder %v683, 8.507059e+37
    %v685 = vand.u32 %v673, 2147483648
    %v686 = vor.u32 1.1754944e-38, %v685
    %v687 = vsel %vm684, %v686, %v682
    %v688 = vmul.f32 1.0, %v687
    %v689 = vtanh.pop %v669
    %v690 = vmul.f32 %v688, %v531
    %692 = vrot.lane.b32.xlu0 %v689, 64
    %v693 = vpop.permute.xlu0 %692
    %v695 = vmul.f32 %v688, %v693
    %697 = vrot.lane.b32.xlu0 %v695, 32
    %v698 = vpop.permute.xlu0 %697
    %v700 = vadd.f32 %v690, %v698
    %v701 = vtanh.pop %v700
    %703 = vrot.lane.b32.xlu0 %v701, 64
    %v704 = vpop.permute.xlu0 %703
    %v706 = vmul.f32 %v688, %v704
    %v707 = vadd.f32 %v664, %v366
    %v708 = vxor.u32 %v707, 2147483648
    %v709 = vmul.f32 %v708, 1.442695
    %v710 = vpow.pop %v709
    %v711 = vadd.f32 %v710, 1.0
    %v712 = vrcp.pop %v711
    %v713 = vmul.f32 %v711, %v712
    %v714 = vsub.f32 1.0, %v713
    %v715 = vmul.f32 %v712, %v714
    %v716 = vadd.f32 %v712, %v715
    %vm717 = vweird.f32 %v711
    %vm718 = vweird.f32 %v712
    %vm719 = vmor %vm717, %vm718
    %v720 = vsel %vm719, %v712, %v716
    %v721 = vand.u32 2147483647, %v711
    %vm722 = vcmp.eq.f32.partialorder %v721, 8.507059e+37
    %v723 = vand.u32 %v711, 2147483648
    %v724 = vor.u32 1.1754944e-38, %v723
    %v725 = vsel %vm722, %v724, %v720
    %v726 = vmul.f32 1.0, %v725
    %v727 = vtanh.pop %v707
    %v728 = vmul.f32 %v726, %v569
    %730 = vrot.lane.b32.xlu0 %v727, 64
    %v731 = vpop.permute.xlu0 %730
    %v733 = vmul.f32 %v726, %v731
    %735 = vrot.lane.b32.xlu0 %v733, 32
    %v736 = vpop.permute.xlu0 %735
    %v738 = vadd.f32 %v728, %v736
    %v739 = vtanh.pop %v738
    %741 = vrot.lane.b32.xlu0 %v739, 64
    %v742 = vpop.permute.xlu0 %741
    %v744 = vmul.f32 %v726, %v742
    %746 = vrot.lane.b32.xlu0 %v744, 32
    %v747 = vpop.permute.xlu0 %746
    %v748 = vsel %vm170, %v747, 0
    %750 = vmatpush.msra.mxu0 0.0
    %751 = vmatpush.msra.mxu0 0.0
    %752 = vmatpush.msra.mxu0 0.0
    %753 = vmatpush.msra.mxu0 0.0
    %754 = vmatpush.msra.mxu0 0.0
    %755 = vmatpush.msra.mxu0 0.0
    %756 = vmatpush.msra.mxu0 0.0
    %757 = vmatpush.msra.mxu0 0.0
    %758 = vmatpush.msra.mxu0 0.0
    %759 = vmatpush.msra.mxu0 0.0
    %760 = vmatpush.msra.mxu0 0.0
    %761 = vmatpush.msra.mxu0 0.0
    %762 = vmatpush.msra.mxu0 %v161
    %763 = vmatpush.msra.mxu0 %v159
    %764 = vmatpush.msra.mxu0 %v157
    %765 = vmatpush.msra.mxu0 %v155
    %766 = vmatmul.f32.gmra.mxu0 %v748
    %v767 = vpop.f32.mrf.mxu0
    %v768 = vadd.f32 0.0, %v767
    %769 = vdwg.mxu0
    %770 = vmatpush.msra.mxu0 0.0
    %771 = vmatpush.msra.mxu0 0.0
    %772 = vmatpush.msra.mxu0 0.0
    %773 = vmatpush.msra.mxu0 0.0
    %774 = vmatpush.msra.mxu0 0.0
    %775 = vmatpush.msra.mxu0 0.0
    %776 = vmatpush.msra.mxu0 0.0
    %777 = vmatpush.msra.mxu0 0.0
    %778 = vmatpush.msra.mxu0 0.0
    %779 = vmatpush.msra.mxu0 0.0
    %780 = vmatpush.msra.mxu0 0.0
    %781 = vmatpush.msra.mxu0 0.0
    %782 = vmatpush.msra.mxu0 %v162
    %783 = vmatpush.msra.mxu0 %v160
    %784 = vmatpush.msra.mxu0 %v158
    %785 = vmatpush.msra.mxu0 %v156
    %786 = vmatmul.f32.gmra.mxu0 %v748
    %v787 = vpop.f32.mrf.mxu0
    %v788 = vadd.f32 0.0, %v787
    %789 = vdwg.mxu0
    %791 = vrot.lane.b32.xlu0 %v706, 32
    %v792 = vpop.permute.xlu0 %791
    %v793 = vsel %vm170, %v792, 0
    %795 = vmatpush.msra.mxu0 0.0
    %796 = vmatpush.msra.mxu0 0.0
    %797 = vmatpush.msra.mxu0 0.0
    %798 = vmatpush.msra.mxu0 0.0
    %799 = vmatpush.msra.mxu0 0.0
    %800 = vmatpush.msra.mxu0 0.0
    %801 = vmatpush.msra.mxu0 0.0
    %802 = vmatpush.msra.mxu0 0.0
    %803 = vmatpush.msra.mxu0 0.0
    %804 = vmatpush.msra.mxu0 0.0
    %805 = vmatpush.msra.mxu0 0.0
    %806 = vmatpush.msra.mxu0 0.0
    %807 = vmatpush.msra.mxu0 %v152
    %808 = vmatpush.msra.mxu0 %v150
    %809 = vmatpush.msra.mxu0 %v148
    %810 = vmatpush.msra.mxu0 %v146
    %811 = vmatmul.f32.gmra.mxu0 %v793
    %v812 = vpop.f32.mrf.mxu0
    %v813 = vadd.f32 %v768, %v812
    %814 = vdwg.mxu0
    %815 = vmatpush.msra.mxu0 0.0
    %816 = vmatpush.msra.mxu0 0.0
    %817 = vmatpush.msra.mxu0 0.0
    %818 = vmatpush.msra.mxu0 0.0
    %819 = vmatpush.msra.mxu0 0.0
    %820 = vmatpush.msra.mxu0 0.0
    %821 = vmatpush.msra.mxu0 0.0
    %822 = vmatpush.msra.mxu0 0.0
    %823 = vmatpush.msra.mxu0 0.0
    %824 = vmatpush.msra.mxu0 0.0
    %825 = vmatpush.msra.mxu0 0.0
    %826 = vmatpush.msra.mxu0 0.0
    %827 = vmatpush.msra.mxu0 %v153
    %828 = vmatpush.msra.mxu0 %v151
    %829 = vmatpush.msra.mxu0 %v149
    %830 = vmatpush.msra.mxu0 %v147
    %831 = vmatmul.f32.gmra.mxu0 %v793
    %v832 = vpop.f32.mrf.mxu0
    %v833 = vadd.f32 %v788, %v832
    %834 = vdwg.mxu0
    %v835 = vadd.f32 %v813, %v141
    %v836 = vxor.u32 %v835, 2147483648
    %v837 = vmul.f32 %v836, 1.442695
    %v838 = vpow.pop %v837
    %v839 = vadd.f32 %v838, 1.0
    %v840 = vrcp.pop %v839
    %v841 = vmul.f32 %v839, %v840
    %v842 = vsub.f32 1.0, %v841
    %v843 = vmul.f32 %v840, %v842
    %v844 = vadd.f32 %v840, %v843
    %vm845 = vweird.f32 %v839
    %vm846 = vweird.f32 %v840
    %vm847 = vmor %vm845, %vm846
    %v848 = vsel %vm847, %v840, %v844
    %v849 = vand.u32 2147483647, %v839
    %vm850 = vcmp.eq.f32.partialorder %v849, 8.507059e+37
    %v851 = vand.u32 %v839, 2147483648
    %v852 = vor.u32 1.1754944e-38, %v851
    %v853 = vsel %vm850, %v852, %v848
    %v854 = vmul.f32 1.0, %v853
    %v855 = vtanh.pop %v835
    %v856 = vmul.f32 %v854, %v700
    %858 = vrot.lane.b32.xlu0 %v855, 64
    %v859 = vpop.permute.xlu0 %858
    %v861 = vmul.f32 %v854, %v859
    %863 = vrot.lane.b32.xlu0 %v861, 32
    %v864 = vpop.permute.xlu0 %863
    %v866 = vadd.f32 %v856, %v864
    %v867 = vtanh.pop %v866
    %869 = vrot.lane.b32.xlu0 %v867, 64
    %v870 = vpop.permute.xlu0 %869
    %v872 = vmul.f32 %v854, %v870
    %v873 = vadd.f32 %v833, %v366
    %v874 = vxor.u32 %v873, 2147483648
    %v875 = vmul.f32 %v874, 1.442695
    %v876 = vpow.pop %v875
    %v877 = vadd.f32 %v876, 1.0
    %v878 = vrcp.pop %v877
    %v879 = vmul.f32 %v877, %v878
    %v880 = vsub.f32 1.0, %v879
    %v881 = vmul.f32 %v878, %v880
    %v882 = vadd.f32 %v878, %v881
    %vm883 = vweird.f32 %v877
    %vm884 = vweird.f32 %v878
    %vm885 = vmor %vm883, %vm884
    %v886 = vsel %vm885, %v878, %v882
    %v887 = vand.u32 2147483647, %v877
    %vm888 = vcmp.eq.f32.partialorder %v887, 8.507059e+37
    %v889 = vand.u32 %v877, 2147483648
    %v890 = vor.u32 1.1754944e-38, %v889
    %v891 = vsel %vm888, %v890, %v886
    %v892 = vmul.f32 1.0, %v891
    %v893 = vtanh.pop %v873
    %v894 = vmul.f32 %v892, %v738
    %896 = vrot.lane.b32.xlu0 %v893, 64
    %v897 = vpop.permute.xlu0 %896
    %v899 = vmul.f32 %v892, %v897
    %901 = vrot.lane.b32.xlu0 %v899, 32
    %v902 = vpop.permute.xlu0 %901
    %v904 = vadd.f32 %v894, %v902
    %v905 = vtanh.pop %v904
    %907 = vrot.lane.b32.xlu0 %v905, 64
    %v908 = vpop.permute.xlu0 %907
    %v910 = vmul.f32 %v892, %v908
    %912 = vrot.lane.b32.xlu0 %v910, 32
    %v913 = vpop.permute.xlu0 %912
    %v914 = vsel %vm170, %v913, 0
    %916 = vmatpush.msra.mxu0 0.0
    %917 = vmatpush.msra.mxu0 0.0
    %918 = vmatpush.msra.mxu0 0.0
    %919 = vmatpush.msra.mxu0 0.0
    %920 = vmatpush.msra.mxu0 0.0
    %921 = vmatpush.msra.mxu0 0.0
    %922 = vmatpush.msra.mxu0 0.0
    %923 = vmatpush.msra.mxu0 0.0
    %924 = vmatpush.msra.mxu0 0.0
    %925 = vmatpush.msra.mxu0 0.0
    %926 = vmatpush.msra.mxu0 0.0
    %927 = vmatpush.msra.mxu0 0.0
    %928 = vmatpush.msra.mxu0 %v161
    %929 = vmatpush.msra.mxu0 %v159
    %930 = vmatpush.msra.mxu0 %v157
    %931 = vmatpush.msra.mxu0 %v155
    %932 = vmatmul.f32.gmra.mxu0 %v914
    %v933 = vpop.f32.mrf.mxu0
    %v934 = vadd.f32 0.0, %v933
    %935 = vdwg.mxu0
    %936 = vmatpush.msra.mxu0 0.0
    %937 = vmatpush.msra.mxu0 0.0
    %938 = vmatpush.msra.mxu0 0.0
    %939 = vmatpush.msra.mxu0 0.0
    %940 = vmatpush.msra.mxu0 0.0
    %941 = vmatpush.msra.mxu0 0.0
    %942 = vmatpush.msra.mxu0 0.0
    %943 = vmatpush.msra.mxu0 0.0
    %944 = vmatpush.msra.mxu0 0.0
    %945 = vmatpush.msra.mxu0 0.0
    %946 = vmatpush.msra.mxu0 0.0
    %947 = vmatpush.msra.mxu0 0.0
    %948 = vmatpush.msra.mxu0 %v162
    %949 = vmatpush.msra.mxu0 %v160
    %950 = vmatpush.msra.mxu0 %v158
    %951 = vmatpush.msra.mxu0 %v156
    %952 = vmatmul.f32.gmra.mxu0 %v914
    %v953 = vpop.f32.mrf.mxu0
    %v954 = vadd.f32 0.0, %v953
    %955 = vdwg.mxu0
    %957 = vrot.lane.b32.xlu0 %v872, 32
    %v958 = vpop.permute.xlu0 %957
    %v959 = vsel %vm170, %v958, 0
    %961 = vmatpush.msra.mxu0 0.0
    %962 = vmatpush.msra.mxu0 0.0
    %963 = vmatpush.msra.mxu0 0.0
    %964 = vmatpush.msra.mxu0 0.0
    %965 = vmatpush.msra.mxu0 0.0
    %966 = vmatpush.msra.mxu0 0.0
    %967 = vmatpush.msra.mxu0 0.0
    %968 = vmatpush.msra.mxu0 0.0
    %969 = vmatpush.msra.mxu0 0.0
    %970 = vmatpush.msra.mxu0 0.0
    %971 = vmatpush.msra.mxu0 0.0
    %972 = vmatpush.msra.mxu0 0.0
    %973 = vmatpush.msra.mxu0 %v152
    %974 = vmatpush.msra.mxu0 %v150
    %975 = vmatpush.msra.mxu0 %v148
    %976 = vmatpush.msra.mxu0 %v146
    %977 = vmatmul.f32.gmra.mxu0 %v959
    %v978 = vpop.f32.mrf.mxu0
    %v979 = vadd.f32 %v934, %v978
    %980 = vdwg.mxu0
    %981 = vmatpush.msra.mxu0 0.0
    %982 = vmatpush.msra.mxu0 0.0
    %983 = vmatpush.msra.mxu0 0.0
    %984 = vmatpush.msra.mxu0 0.0
    %985 = vmatpush.msra.mxu0 0.0
    %986 = vmatpush.msra.mxu0 0.0
    %987 = vmatpush.msra.mxu0 0.0
    %988 = vmatpush.msra.mxu0 0.0
    %989 = vmatpush.msra.mxu0 0.0
    %990 = vmatpush.msra.mxu0 0.0
    %991 = vmatpush.msra.mxu0 0.0
    %992 = vmatpush.msra.mxu0 0.0
    %993 = vmatpush.msra.mxu0 %v153
    %994 = vmatpush.msra.mxu0 %v151
    %995 = vmatpush.msra.mxu0 %v149
    %996 = vmatpush.msra.mxu0 %v147
    %997 = vmatmul.f32.gmra.mxu0 %v959
    %v998 = vpop.f32.mrf.mxu0
    %v999 = vadd.f32 %v954, %v998
    %1000 = vdwg.mxu0
    %v1002 = vrot.slane %v141, 4
    %v1004 = vadd.f32 %v979, %v1002
    %v1005 = vxor.u32 %v1004, 2147483648
    %v1006 = vmul.f32 %v1005, 1.442695
    %v1007 = vpow.pop %v1006
    %v1008 = vadd.f32 %v1007, 1.0
    %v1009 = vrcp.pop %v1008
    %v1010 = vmul.f32 %v1008, %v1009
    %v1011 = vsub.f32 1.0, %v1010
    %v1012 = vmul.f32 %v1009, %v1011
    %v1013 = vadd.f32 %v1009, %v1012
    %vm1014 = vweird.f32 %v1008
    %vm1015 = vweird.f32 %v1009
    %vm1016 = vmor %vm1014, %vm1015
    %v1017 = vsel %vm1016, %v1009, %v1013
    %v1018 = vand.u32 2147483647, %v1008
    %vm1019 = vcmp.eq.f32.partialorder %v1018, 8.507059e+37
    %v1020 = vand.u32 %v1008, 2147483648
    %v1021 = vor.u32 1.1754944e-38, %v1020
    %v1022 = vsel %vm1019, %v1021, %v1017
    %v1023 = vmul.f32 1.0, %v1022
    %v1024 = vtanh.pop %v1004
    %v1025 = vmul.f32 %v1023, %v866
    %1027 = vrot.lane.b32.xlu0 %v1024, 64
    %v1028 = vpop.permute.xlu0 %1027
    %v1030 = vmul.f32 %v1023, %v1028
    %1032 = vrot.lane.b32.xlu0 %v1030, 32
    %v1033 = vpop.permute.xlu0 %1032
    %v1035 = vadd.f32 %v1025, %v1033
    %v1036 = vtanh.pop %v1035
    %1038 = vrot.lane.b32.xlu0 %v1036, 64
    %v1039 = vpop.permute.xlu0 %1038
    %v1041 = vmul.f32 %v1023, %v1039
    %v1042 = vadd.f32 %v999, %v366
    %v1043 = vxor.u32 %v1042, 2147483648
    %v1044 = vmul.f32 %v1043, 1.442695
    %v1045 = vpow.pop %v1044
    %v1046 = vadd.f32 %v1045, 1.0
    %v1047 = vrcp.pop %v1046
    %v1048 = vmul.f32 %v1046, %v1047
    %v1049 = vsub.f32 1.0, %v1048
    %v1050 = vmul.f32 %v1047, %v1049
    %v1051 = vadd.f32 %v1047, %v1050
    %vm1052 = vweird.f32 %v1046
    %vm1053 = vweird.f32 %v1047
    %vm1054 = vmor %vm1052, %vm1053
    %v1055 = vsel %vm1054, %v1047, %v1051
    %v1056 = vand.u32 2147483647, %v1046
    %vm1057 = vcmp.eq.f32.partialorder %v1056, 8.507059e+37
    %v1058 = vand.u32 %v1046, 2147483648
    %v1059 = vor.u32 1.1754944e-38, %v1058
    %v1060 = vsel %vm1057, %v1059, %v1055
    %v1061 = vmul.f32 1.0, %v1060
    %v1062 = vtanh.pop %v1042
    %v1063 = vmul.f32 %v1061, %v904
    %1065 = vrot.lane.b32.xlu0 %v1062, 64
    %v1066 = vpop.permute.xlu0 %1065
    %v1068 = vmul.f32 %v1061, %v1066
    %1070 = vrot.lane.b32.xlu0 %v1068, 32
    %v1071 = vpop.permute.xlu0 %1070
    %v1073 = vadd.f32 %v1063, %v1071
    %v1074 = vtanh.pop %v1073
    %1076 = vrot.lane.b32.xlu0 %v1074, 64
    %v1077 = vpop.permute.xlu0 %1076
    %v1079 = vmul.f32 %v1061, %v1077
    %1081 = vrot.lane.b32.xlu0 %v1079, 32
    %v1082 = vpop.permute.xlu0 %1081
    %v1083 = vsel %vm170, %v1082, 0
    %1085 = vmatpush.msra.mxu0 0.0
    %1086 = vmatpush.msra.mxu0 0.0
    %1087 = vmatpush.msra.mxu0 0.0
    %1088 = vmatpush.msra.mxu0 0.0
    %1089 = vmatpush.msra.mxu0 0.0
    %1090 = vmatpush.msra.mxu0 0.0
    %1091 = vmatpush.msra.mxu0 0.0
    %1092 = vmatpush.msra.mxu0 0.0
    %1093 = vmatpush.msra.mxu0 0.0
    %1094 = vmatpush.msra.mxu0 0.0
    %1095 = vmatpush.msra.mxu0 0.0
    %1096 = vmatpush.msra.mxu0 0.0
    %1097 = vmatpush.msra.mxu0 %v161
    %1098 = vmatpush.msra.mxu0 %v159
    %1099 = vmatpush.msra.mxu0 %v157
    %1100 = vmatpush.msra.mxu0 %v155
    %1101 = vmatmul.f32.gmra.mxu0 %v1083
    %v1102 = vpop.f32.mrf.mxu0
    %v1103 = vadd.f32 0.0, %v1102
    %1104 = vdwg.mxu0
    %1105 = vmatpush.msra.mxu0 0.0
    %1106 = vmatpush.msra.mxu0 0.0
    %1107 = vmatpush.msra.mxu0 0.0
    %1108 = vmatpush.msra.mxu0 0.0
    %1109 = vmatpush.msra.mxu0 0.0
    %1110 = vmatpush.msra.mxu0 0.0
    %1111 = vmatpush.msra.mxu0 0.0
    %1112 = vmatpush.msra.mxu0 0.0
    %1113 = vmatpush.msra.mxu0 0.0
    %1114 = vmatpush.msra.mxu0 0.0
    %1115 = vmatpush.msra.mxu0 0.0
    %1116 = vmatpush.msra.mxu0 0.0
    %1117 = vmatpush.msra.mxu0 %v162
    %1118 = vmatpush.msra.mxu0 %v160
    %1119 = vmatpush.msra.mxu0 %v158
    %1120 = vmatpush.msra.mxu0 %v156
    %1121 = vmatmul.f32.gmra.mxu0 %v1083
    %v1122 = vpop.f32.mrf.mxu0
    %v1123 = vadd.f32 0.0, %v1122
    %1124 = vdwg.mxu0
    %1126 = vrot.lane.b32.xlu0 %v1041, 32
    %v1127 = vpop.permute.xlu0 %1126
    %v1128 = vsel %vm170, %v1127, 0
    %1130 = vmatpush.msra.mxu0 0.0
    %1131 = vmatpush.msra.mxu0 0.0
    %1132 = vmatpush.msra.mxu0 0.0
    %1133 = vmatpush.msra.mxu0 0.0
    %1134 = vmatpush.msra.mxu0 0.0
    %1135 = vmatpush.msra.mxu0 0.0
    %1136 = vmatpush.msra.mxu0 0.0
    %1137 = vmatpush.msra.mxu0 0.0
    %1138 = vmatpush.msra.mxu0 0.0
    %1139 = vmatpush.msra.mxu0 0.0
    %1140 = vmatpush.msra.mxu0 0.0
    %1141 = vmatpush.msra.mxu0 0.0
    %1142 = vmatpush.msra.mxu0 %v152
    %1143 = vmatpush.msra.mxu0 %v150
    %1144 = vmatpush.msra.mxu0 %v148
    %1145 = vmatpush.msra.mxu0 %v146
    %1146 = vmatmul.f32.gmra.mxu0 %v1128
    %v1147 = vpop.f32.mrf.mxu0
    %v1148 = vadd.f32 %v1103, %v1147
    %1149 = vdwg.mxu0
    %1150 = vmatpush.msra.mxu0 0.0
    %1151 = vmatpush.msra.mxu0 0.0
    %1152 = vmatpush.msra.mxu0 0.0
    %1153 = vmatpush.msra.mxu0 0.0
    %1154 = vmatpush.msra.mxu0 0.0
    %1155 = vmatpush.msra.mxu0 0.0
    %1156 = vmatpush.msra.mxu0 0.0
    %1157 = vmatpush.msra.mxu0 0.0
    %1158 = vmatpush.msra.mxu0 0.0
    %1159 = vmatpush.msra.mxu0 0.0
    %1160 = vmatpush.msra.mxu0 0.0
    %1161 = vmatpush.msra.mxu0 0.0
    %1162 = vmatpush.msra.mxu0 %v153
    %1163 = vmatpush.msra.mxu0 %v151
    %1164 = vmatpush.msra.mxu0 %v149
    %1165 = vmatpush.msra.mxu0 %v147
    %1166 = vmatmul.f32.gmra.mxu0 %v1128
    %v1167 = vpop.f32.mrf.mxu0
    %v1168 = vadd.f32 %v1123, %v1167
    %1169 = vdwg.mxu0
    %v1170 = vadd.f32 %v1148, %v144
    %v1171 = vxor.u32 %v1170, 2147483648
    %v1172 = vmul.f32 %v1171, 1.442695
    %v1173 = vpow.pop %v1172
    %v1174 = vadd.f32 %v1173, 1.0
    %v1175 = vrcp.pop %v1174
    %v1176 = vmul.f32 %v1174, %v1175
    %v1177 = vsub.f32 1.0, %v1176
    %v1178 = vmul.f32 %v1175, %v1177
    %v1179 = vadd.f32 %v1175, %v1178
    %vm1180 = vweird.f32 %v1174
    %vm1181 = vweird.f32 %v1175
    %vm1182 = vmor %vm1180, %vm1181
    %v1183 = vsel %vm1182, %v1175, %v1179
    %v1184 = vand.u32 2147483647, %v1174
    %vm1185 = vcmp.eq.f32.partialorder %v1184, 8.507059e+37
    %v1186 = vand.u32 %v1174, 2147483648
    %v1187 = vor.u32 1.1754944e-38, %v1186
    %v1188 = vsel %vm1185, %v1187, %v1183
    %v1189 = vmul.f32 1.0, %v1188
    %v1190 = vtanh.pop %v1170
    %v1191 = vmul.f32 %v1189, %v1035
    %1193 = vrot.lane.b32.xlu0 %v1190, 64
    %v1194 = vpop.permute.xlu0 %1193
    %v1196 = vmul.f32 %v1189, %v1194
    %1198 = vrot.lane.b32.xlu0 %v1196, 32
    %v1199 = vpop.permute.xlu0 %1198
    %v1201 = vadd.f32 %v1191, %v1199
    %v1202 = vtanh.pop %v1201
    %1204 = vrot.lane.b32.xlu0 %v1202, 64
    %v1205 = vpop.permute.xlu0 %1204
    %v1207 = vmul.f32 %v1189, %v1205
    %v1208 = vadd.f32 %v1168, %v366
    %v1209 = vxor.u32 %v1208, 2147483648
    %v1210 = vmul.f32 %v1209, 1.442695
    %v1211 = vpow.pop %v1210
    %v1212 = vadd.f32 %v1211, 1.0
    %v1213 = vrcp.pop %v1212
    %v1214 = vmul.f32 %v1212, %v1213
    %v1215 = vsub.f32 1.0, %v1214
    %v1216 = vmul.f32 %v1213, %v1215
    %v1217 = vadd.f32 %v1213, %v1216
    %vm1218 = vweird.f32 %v1212
    %vm1219 = vweird.f32 %v1213
    %vm1220 = vmor %vm1218, %vm1219
    %v1221 = vsel %vm1220, %v1213, %v1217
    %v1222 = vand.u32 2147483647, %v1212
    %vm1223 = vcmp.eq.f32.partialorder %v1222, 8.507059e+37
    %v1224 = vand.u32 %v1212, 2147483648
    %v1225 = vor.u32 1.1754944e-38, %v1224
    %v1226 = vsel %vm1223, %v1225, %v1221
    %v1227 = vmul.f32 1.0, %v1226
    %v1228 = vtanh.pop %v1208
    %v1229 = vmul.f32 %v1227, %v1073
    %1231 = vrot.lane.b32.xlu0 %v1228, 64
    %v1232 = vpop.permute.xlu0 %1231
    %v1234 = vmul.f32 %v1227, %v1232
    %1236 = vrot.lane.b32.xlu0 %v1234, 32
    %v1237 = vpop.permute.xlu0 %1236
    %v1239 = vadd.f32 %v1229, %v1237
    %v1240 = vtanh.pop %v1239
    %1242 = vrot.lane.b32.xlu0 %v1240, 64
    %v1243 = vpop.permute.xlu0 %1242
    %v1245 = vmul.f32 %v1227, %v1243
    %1247 = vrot.lane.b32.xlu0 %v1245, 32
    %v1248 = vpop.permute.xlu0 %1247
    %v1249 = vsel %vm170, %v1248, 0
    %1251 = vmatpush.msra.mxu0 0.0
    %1252 = vmatpush.msra.mxu0 0.0
    %1253 = vmatpush.msra.mxu0 0.0
    %1254 = vmatpush.msra.mxu0 0.0
    %1255 = vmatpush.msra.mxu0 0.0
    %1256 = vmatpush.msra.mxu0 0.0
    %1257 = vmatpush.msra.mxu0 0.0
    %1258 = vmatpush.msra.mxu0 0.0
    %1259 = vmatpush.msra.mxu0 0.0
    %1260 = vmatpush.msra.mxu0 0.0
    %1261 = vmatpush.msra.mxu0 0.0
    %1262 = vmatpush.msra.mxu0 0.0
    %1263 = vmatpush.msra.mxu0 %v161
    %1264 = vmatpush.msra.mxu0 %v159
    %1265 = vmatpush.msra.mxu0 %v157
    %1266 = vmatpush.msra.mxu0 %v155
    %1267 = vmatmul.f32.gmra.mxu0 %v1249
    %v1268 = vpop.f32.mrf.mxu0
    %v1269 = vadd.f32 0.0, %v1268
    %1270 = vdwg.mxu0
    %1271 = vmatpush.msra.mxu0 0.0
    %1272 = vmatpush.msra.mxu0 0.0
    %1273 = vmatpush.msra.mxu0 0.0
    %1274 = vmatpush.msra.mxu0 0.0
    %1275 = vmatpush.msra.mxu0 0.0
    %1276 = vmatpush.msra.mxu0 0.0
    %1277 = vmatpush.msra.mxu0 0.0
    %1278 = vmatpush.msra.mxu0 0.0
    %1279 = vmatpush.msra.mxu0 0.0
    %1280 = vmatpush.msra.mxu0 0.0
    %1281 = vmatpush.msra.mxu0 0.0
    %1282 = vmatpush.msra.mxu0 0.0
    %1283 = vmatpush.msra.mxu0 %v162
    %1284 = vmatpush.msra.mxu0 %v160
    %1285 = vmatpush.msra.mxu0 %v158
    %1286 = vmatpush.msra.mxu0 %v156
    %1287 = vmatmul.f32.gmra.mxu0 %v1249
    %v1288 = vpop.f32.mrf.mxu0
    %v1289 = vadd.f32 0.0, %v1288
    %1290 = vdwg.mxu0
    %1292 = vrot.lane.b32.xlu0 %v1207, 32
    %v1293 = vpop.permute.xlu0 %1292
    %v1294 = vsel %vm170, %v1293, 0
    %1296 = vmatpush.msra.mxu0 0.0
    %1297 = vmatpush.msra.mxu0 0.0
    %1298 = vmatpush.msra.mxu0 0.0
    %1299 = vmatpush.msra.mxu0 0.0
    %1300 = vmatpush.msra.mxu0 0.0
    %1301 = vmatpush.msra.mxu0 0.0
    %1302 = vmatpush.msra.mxu0 0.0
    %1303 = vmatpush.msra.mxu0 0.0
    %1304 = vmatpush.msra.mxu0 0.0
    %1305 = vmatpush.msra.mxu0 0.0
    %1306 = vmatpush.msra.mxu0 0.0
    %1307 = vmatpush.msra.mxu0 0.0
    %1308 = vmatpush.msra.mxu0 %v152
    %1309 = vmatpush.msra.mxu0 %v150
    %1310 = vmatpush.msra.mxu0 %v148
    %1311 = vmatpush.msra.mxu0 %v146
    %1312 = vmatmul.f32.gmra.mxu0 %v1294
    %v1313 = vpop.f32.mrf.mxu0
    %v1314 = vadd.f32 %v1269, %v1313
    %1315 = vdwg.mxu0
    %1316 = vmatpush.msra.mxu0 0.0
    %1317 = vmatpush.msra.mxu0 0.0
    %1318 = vmatpush.msra.mxu0 0.0
    %1319 = vmatpush.msra.mxu0 0.0
    %1320 = vmatpush.msra.mxu0 0.0
    %1321 = vmatpush.msra.mxu0 0.0
    %1322 = vmatpush.msra.mxu0 0.0
    %1323 = vmatpush.msra.mxu0 0.0
    %1324 = vmatpush.msra.mxu0 0.0
    %1325 = vmatpush.msra.mxu0 0.0
    %1326 = vmatpush.msra.mxu0 0.0
    %1327 = vmatpush.msra.mxu0 0.0
    %1328 = vmatpush.msra.mxu0 %v153
    %1329 = vmatpush.msra.mxu0 %v151
    %1330 = vmatpush.msra.mxu0 %v149
    %1331 = vmatpush.msra.mxu0 %v147
    %1332 = vmatmul.f32.gmra.mxu0 %v1294
    %v1333 = vpop.f32.mrf.mxu0
    %v1334 = vadd.f32 %v1289, %v1333
    %1335 = vdwg.mxu0
    %v1337 = vrot.slane %v144, 4
    %v1339 = vadd.f32 %v1314, %v1337
    %v1340 = vxor.u32 %v1339, 2147483648
    %v1341 = vmul.f32 %v1340, 1.442695
    %v1342 = vpow.pop %v1341
    %v1343 = vadd.f32 %v1342, 1.0
    %v1344 = vrcp.pop %v1343
    %v1345 = vmul.f32 %v1343, %v1344
    %v1346 = vsub.f32 1.0, %v1345
    %v1347 = vmul.f32 %v1344, %v1346
    %v1348 = vadd.f32 %v1344, %v1347
    %vm1349 = vweird.f32 %v1343
    %vm1350 = vweird.f32 %v1344
    %vm1351 = vmor %vm1349, %vm1350
    %v1352 = vsel %vm1351, %v1344, %v1348
    %v1353 = vand.u32 2147483647, %v1343
    %vm1354 = vcmp.eq.f32.partialorder %v1353, 8.507059e+37
    %v1355 = vand.u32 %v1343, 2147483648
    %v1356 = vor.u32 1.1754944e-38, %v1355
    %v1357 = vsel %vm1354, %v1356, %v1352
    %v1358 = vmul.f32 1.0, %v1357
    %v1359 = vtanh.pop %v1339
    %v1360 = vmul.f32 %v1358, %v1201
    %1362 = vrot.lane.b32.xlu0 %v1359, 64
    %v1363 = vpop.permute.xlu0 %1362
    %v1365 = vmul.f32 %v1358, %v1363
    %1367 = vrot.lane.b32.xlu0 %v1365, 32
    %v1368 = vpop.permute.xlu0 %1367
    %v1370 = vadd.f32 %v1360, %v1368
    %v1371 = vtanh.pop %v1370
    %1373 = vrot.lane.b32.xlu0 %v1371, 64
    %v1374 = vpop.permute.xlu0 %1373
    %v1376 = vmul.f32 %v1358, %v1374
    %v1377 = vadd.f32 %v1334, %v366
    %v1378 = vxor.u32 %v1377, 2147483648
    %v1379 = vmul.f32 %v1378, 1.442695
    %v1380 = vpow.pop %v1379
    %v1381 = vadd.f32 %v1380, 1.0
    %v1382 = vrcp.pop %v1381
    %v1383 = vmul.f32 %v1381, %v1382
    %v1384 = vsub.f32 1.0, %v1383
    %v1385 = vmul.f32 %v1382, %v1384
    %v1386 = vadd.f32 %v1382, %v1385
    %vm1387 = vweird.f32 %v1381
    %vm1388 = vweird.f32 %v1382
    %vm1389 = vmor %vm1387, %vm1388
    %v1390 = vsel %vm1389, %v1382, %v1386
    %v1391 = vand.u32 2147483647, %v1381
    %vm1392 = vcmp.eq.f32.partialorder %v1391, 8.507059e+37
    %v1393 = vand.u32 %v1381, 2147483648
    %v1394 = vor.u32 1.1754944e-38, %v1393
    %v1395 = vsel %vm1392, %v1394, %v1390
    %v1396 = vmul.f32 1.0, %v1395
    %v1397 = vtanh.pop %v1377
    %v1398 = vmul.f32 %v1396, %v1239
    %1400 = vrot.lane.b32.xlu0 %v1397, 64
    %v1401 = vpop.permute.xlu0 %1400
    %v1403 = vmul.f32 %v1396, %v1401
    %1405 = vrot.lane.b32.xlu0 %v1403, 32
    %v1406 = vpop.permute.xlu0 %1405
    %v1408 = vadd.f32 %v1398, %v1406
    %v1409 = vtanh.pop %v1408
    %1411 = vrot.lane.b32.xlu0 %v1409, 64
    %v1412 = vpop.permute.xlu0 %1411
    %v1414 = vmul.f32 %v1396, %v1412
    %1416 = vrot.lane.b32.xlu0 %v1414, 32
    %v1417 = vpop.permute.xlu0 %1416
    %v1418 = vsel %vm170, %v1417, 0
    %1420 = vmatpush.msra.mxu0 0.0
    %1421 = vmatpush.msra.mxu0 0.0
    %1422 = vmatpush.msra.mxu0 0.0
    %1423 = vmatpush.msra.mxu0 0.0
    %1424 = vmatpush.msra.mxu0 0.0
    %1425 = vmatpush.msra.mxu0 0.0
    %1426 = vmatpush.msra.mxu0 0.0
    %1427 = vmatpush.msra.mxu0 0.0
    %1428 = vmatpush.msra.mxu0 0.0
    %1429 = vmatpush.msra.mxu0 0.0
    %1430 = vmatpush.msra.mxu0 0.0
    %1431 = vmatpush.msra.mxu0 0.0
    %1432 = vmatpush.msra.mxu0 %v162
    %1433 = vmatpush.msra.mxu0 %v160
    %1434 = vmatpush.msra.mxu0 %v158
    %1435 = vmatpush.msra.mxu0 %v156
    %1436 = vmatmul.f32.gmra.mxu0 %v1418
    %v1437 = vpop.f32.mrf.mxu0
    %v1438 = vadd.f32 0.0, %v1437
    %1439 = vdwg.mxu0
    %1441 = vrot.lane.b32.xlu0 %v1376, 32
    %v1442 = vpop.permute.xlu0 %1441
    %v1443 = vsel %vm170, %v1442, 0
    %1445 = vmatpush.msra.mxu0 0.0
    %1446 = vmatpush.msra.mxu0 0.0
    %1447 = vmatpush.msra.mxu0 0.0
    %1448 = vmatpush.msra.mxu0 0.0
    %1449 = vmatpush.msra.mxu0 0.0
    %1450 = vmatpush.msra.mxu0 0.0
    %1451 = vmatpush.msra.mxu0 0.0
    %1452 = vmatpush.msra.mxu0 0.0
    %1453 = vmatpush.msra.mxu0 0.0
    %1454 = vmatpush.msra.mxu0 0.0
    %1455 = vmatpush.msra.mxu0 0.0
    %1456 = vmatpush.msra.mxu0 0.0
    %1457 = vmatpush.msra.mxu0 %v153
    %1458 = vmatpush.msra.mxu0 %v151
    %1459 = vmatpush.msra.mxu0 %v149
    %1460 = vmatpush.msra.mxu0 %v147
    %1461 = vmatmul.f32.gmra.mxu0 %v1443
    %v1462 = vpop.f32.mrf.mxu0
    %v1463 = vadd.f32 %v1438, %v1462
    %1464 = vdwg.mxu0
    %v1465 = vadd.f32 %v1463, %v366
    %v1466 = vxor.u32 %v1465, 2147483648
    %v1467 = vmul.f32 %v1466, 1.442695
    %v1468 = vpow.pop %v1467
    %v1469 = vadd.f32 %v1468, 1.0
    %v1470 = vrcp.pop %v1469
    %v1471 = vmul.f32 %v1469, %v1470
    %v1472 = vsub.f32 1.0, %v1471
    %v1473 = vmul.f32 %v1470, %v1472
    %v1474 = vadd.f32 %v1470, %v1473
    %vm1475 = vweird.f32 %v1469
    %vm1476 = vweird.f32 %v1470
    %vm1477 = vmor %vm1475, %vm1476
    %v1478 = vsel %vm1477, %v1470, %v1474
    %v1479 = vand.u32 2147483647, %v1469
    %vm1480 = vcmp.eq.f32.partialorder %v1479, 8.507059e+37
    %v1481 = vand.u32 %v1469, 2147483648
    %v1482 = vor.u32 1.1754944e-38, %v1481
    %v1483 = vsel %vm1480, %v1482, %v1478
    %v1484 = vmul.f32 1.0, %v1483
    %v1485 = vtanh.pop %v1465
    %v1486 = vmul.f32 %v1484, %v1408
    %1488 = vrot.lane.b32.xlu0 %v1485, 64
    %v1489 = vpop.permute.xlu0 %1488
    %v1491 = vmul.f32 %v1484, %v1489
    %1493 = vrot.lane.b32.xlu0 %v1491, 32
    %v1494 = vpop.permute.xlu0 %1493
    %v1496 = vadd.f32 %v1486, %v1494
    %v1497 = vtanh.pop %v1496
    %1499 = vrot.lane.b32.xlu0 %v1497, 64
    %v1500 = vpop.permute.xlu0 %1499
    %v1502 = vmul.f32 %v1484, %v1500
    %vm1504 = vcmask 257024
    %1505 = vst.msk [vmem:[%s10] sm:$0xf] %vm1504, %v1442
    %1507 = vrot.lane.b32.xlu0 %v1370, 96
    %v1508 = vpop.permute.xlu0 %1507
    %s1510 = scalar_lea.vmem %s10, 8
    %1511 = vst.msk [vmem:[%s1510] sm:$0xf] %vm1504, %v1508
    %1513 = vrot.lane.b32.xlu0 %v1502, 32
    %v1514 = vpop.permute.xlu0 %1513
    %s1516 = scalar_lea.vmem %s10, 4
    %1517 = vst.msk [vmem:[%s1516] sm:$0xf] %vm1504, %v1514
    %1519 = vrot.lane.b32.xlu0 %v1496, 96
    %v1520 = vpop.permute.xlu0 %1519
    %s1522 = scalar_lea.vmem %s10, 12
    %1523 = vst.msk [vmem:[%s1522] sm:$0xf] %vm1504, %v1520
    %v1524 = vld [vmem:[%s7] sm:$0xff]
    %v1525 = vld [vmem:[%s7 + $0x8] sm:$0xff]
    %v1526 = vld [vmem:[%s7 + $0x10] sm:$0xff]
    %v1527 = vld [vmem:[%s7 + $0x18] sm:$0xff]
    %v1528 = vld [vmem:[%s8] sm:$0x1]
    %v1530 = vperm.slane %v1528, 0
    %v1532 = vsel %vm170, %v1514, 0
    %1534 = vmatpush.msra.mxu0 0.0
    %1535 = vmatpush.msra.mxu0 0.0
    %1536 = vmatpush.msra.mxu0 0.0
    %1537 = vmatpush.msra.mxu0 0.0
    %1538 = vmatpush.msra.mxu0 0.0
    %1539 = vmatpush.msra.mxu0 0.0
    %1540 = vmatpush.msra.mxu0 0.0
    %1541 = vmatpush.msra.mxu0 0.0
    %1542 = vmatpush.msra.mxu0 0.0
    %1543 = vmatpush.msra.mxu0 0.0
    %1544 = vmatpush.msra.mxu0 0.0
    %1545 = vmatpush.msra.mxu0 0.0
    %1546 = vmatpush.msra.mxu0 %v1527
    %1547 = vmatpush.msra.mxu0 %v1526
    %1548 = vmatpush.msra.mxu0 %v1525
    %1549 = vmatpush.msra.mxu0 %v1524
    %1550 = vmatmul.f32.gmra.mxu0 %v1532
    %v1551 = vpop.f32.mrf.mxu0
    %v1552 = vadd.f32 %v1530, %v1551
    %1553 = vdwg.mxu0
    %vm1554 = vcmask 11264
    %1555 = vst.msk [vmem:[%s9] sm:$0xf] %vm1554, %v1552
    // Predicated region
    $region54: #{pytorch_lstm_forward.1} parent=1 // pred_check
      _
    $region55: #{pytorch_lstm_forward.1} parent=1 // pred_check_branch
      %1557 = sbr.rel (0) target = $region57
    $region56: #{pytorch_lstm_forward.1} parent=1 // pred_region
      _
    $region57: #{pytorch_lstm_forward.1} parent=1 // pred_fallthru
      _
    // Predicated region
    $region58: #{pytorch_lstm_forward.1} parent=1 // pred_check
      _
    $region59: #{pytorch_lstm_forward.1} parent=1 // pred_check_branch
      %1559 = sbr.rel (0) target = $region61
    $region60: #{pytorch_lstm_forward.1} parent=1 // pred_region
      _
    $region61: #{pytorch_lstm_forward.1} parent=1 // pred_fallthru
      _
    // Predicated region
    $region62: #{pytorch_lstm_forward.1} parent=1 // pred_check
      _
    $region63: #{pytorch_lstm_forward.1} parent=1 // pred_check_branch
      %1561 = sbr.rel (0) target = $region65
    $region64: #{pytorch_lstm_forward.1} parent=1 // pred_region
      _
    $region65: #{pytorch_lstm_forward.1} parent=1 // pred_fallthru
      _
    // Predicated region
    $region66: #{pytorch_lstm_forward.1} parent=1 // pred_check
      _
    $region67: #{pytorch_lstm_forward.1} parent=1 // pred_check_branch
      %1563 = sbr.rel (0) target = $region69
    $region68: #{pytorch_lstm_forward.1} parent=1 // pred_region
      _
    $region69: #{pytorch_lstm_forward.1} parent=1 // pred_fallthru
      _
    %1564 = vsyncpa [#allocation3], 1
    %1565 = vsyncpa [#allocation5], 1
    %1566 = vsyncpa [#allocation8], 1

</llo_original>
